<compile_context>
chip_gen: v5e
topology: v5e:2x2
jax: 0.10.0
libtpu: 0.0.40
codegen_flags: <defaults>
</compile_context>

<pallas_src>
import numpy as np
import jax
import jax.numpy as jnp
from jax.experimental import pallas as pl
from jax.experimental.pallas import tpu as pltpu

EPSILON = 1e-6
TWO_PI = 2.0 * np.pi
HALF_PI = np.float32(np.pi / 2.0)

# Fused-slab lane layout (designed for emb_dim = hidden_dim = 32 -> exactly 128 lanes):
#   [  0: 64)  [x_row | x_col]            (2*emb)
#   [ 64: 96)  edge_emb lookup            (h)
#   [ 96:104)  [ci0, ci2, cj0, cj2, psin, pcos, 0, 0]
#   [104:112)  coord_diff     | zeros
#   [112:120)  coord_cross    | zeros
#   [120:128)  coord_vertical | zeros
EMB = 32
HID = 32


# --------------------------------------------------------------------------
# Pallas kernel: fused per-edge hot path
# --------------------------------------------------------------------------
def edge_fuse_kernel(
    slab_ref,                   # (TE, 128) packed edge features
    wcat_ref,                   # (64, 160) = [ wn_blk@ws1[:64] | w2d ]          bf16
    b2d_ref,                    # (1, 32)
    wgf2pi_ref,                 # (1, 32)   GaussianFourier W * 2pi
    wfold_ref,                  # (256, 32) = blkdiag(wcoff) @ wp1[2:]           bf16
    wp1ang_ref,                 # (2, 32)   pseudo-angle rows of wp1 (VPU MACs)
    bp1_ref,                    # (1, 32)   bp1 + bcoff-fold
    wp2_ref, bp2_ref,           # project L2: (32, 32) bf16, (1, 32)
    ws1e_ref,                   # (32, 128) ws1 rows for edge_attr               bf16
    bs1_ref,                    # (1, 128)  bs1 + bn-fold
    ws2_ref, bs2_ref,           # score MLP L2: (128, 8) bf16, (1, 8)
    out_ref,                    # (TE, 8) per-edge gradient [gx, gy, gz, 0...]
):
    f32 = jnp.float32
    bf16 = jnp.bfloat16

    slab = slab_ref[...]
    cat_x = slab[:, 0:64].astype(bf16)          # [x_row | x_col]
    ea = slab[:, 64:96]                         # edge_emb(edge_attr)

    # One MXU push on cat_x feeds BOTH the node_emb->score fold and edge_2D_emb.
    catout = jnp.dot(cat_x, wcat_ref[...], preferred_element_type=f32)   # (TE, 160)
    ns1 = catout[:, 0:128]                      # cat_x @ (wn_blk @ ws1[:64])
    edge2d = catout[:, 128:160] + b2d_ref[...] + ea

    # ----- Gaussian Fourier embedding: one 256-lane phase block, one sin, one folded dot ----
    wgf = wgf2pi_ref[...]                       # (1, 32), 2*pi baked in
    p_i0 = slab[:, 96:97] * wgf
    p_i2 = slab[:, 97:98] * wgf
    p_j0 = slab[:, 98:99] * wgf
    p_j2 = slab[:, 99:100] * wgf
    phase = jnp.concatenate(
        [p_i0, p_i0 + HALF_PI, p_i2, p_i2 + HALF_PI,     # cos(x) = sin(x + pi/2)
         p_j0, p_j0 + HALF_PI, p_j2, p_j2 + HALF_PI],
        axis=-1,
    )                                            # (TE, 256)
    four = jnp.sin(phase).astype(bf16)

    # ----- project MLP (coff_mlp pre-folded into L1) -----
    psin = slab[:, 100:101]
    pcos = slab[:, 101:102]
    h1 = (
        jnp.dot(four, wfold_ref[...], preferred_element_type=f32)
        + psin * wp1ang_ref[0:1, :]              # K=2 matmul on the VPU, not the MXU
        + pcos * wp1ang_ref[1:2, :]
        + bp1_ref[...]
    )
    h1 = jax.nn.silu(h1)
    edge3d = jnp.dot(h1.astype(bf16), wp2_ref[...], preferred_element_type=f32) + bp2_ref[...]

    edge_attr = edge2d + edge3d

    # ----- score-network dynamic-coefficient MLP (node_emb pre-folded into ns1) -----
    s1 = jax.nn.silu(
        ns1
        + jnp.dot(edge_attr.astype(bf16), ws1e_ref[...], preferred_element_type=f32)
        + bs1_ref[...]
    )
    dyn = jnp.dot(s1.astype(bf16), ws2_ref[...], preferred_element_type=f32) + bs2_ref[...]

    # ----- equivariant combine on 8-lane-aligned (zero-padded) geometry slots -----
    out_ref[...] = (
        dyn[:, 0:1] * slab[:, 104:112]
        + dyn[:, 1:2] * slab[:, 112:120]
        + dyn[:, 2:3] * slab[:, 120:128]
    )


# --------------------------------------------------------------------------
# Wrapper
# --------------------------------------------------------------------------
def edge_fuse(slab, weights, te):
    e = slab.shape[0]
    assert e % te == 0 and slab.shape[1] == 128
    grid = (e // te,)

    data_spec = pl.BlockSpec((te, 128), lambda i: (i, 0))
    weight_specs = [pl.BlockSpec(w.shape, lambda i: (0, 0)) for w in weights]

    return pl.pallas_call(
        edge_fuse_kernel,
        out_shape=jax.ShapeDtypeStruct((e, 8), jnp.float32),
        grid=grid,
        in_specs=[data_spec] + weight_specs,
        out_specs=pl.BlockSpec((te, 8), lambda i: (i, 0)),
        compiler_params=pltpu.CompilerParams(
            dimension_semantics=("parallel",),
            vmem_limit_bytes=32 * 1024 * 1024,
        ),
    )(slab, *weights)


# --------------------------------------------------------------------------
# Host-side weight preparation (algebraic folds, bf16 MXU operands)
# --------------------------------------------------------------------------
def build_kernel_weights(p):
    emb, h = p["wn"].shape
    assert emb == EMB and h == HID, "fused slab layout assumes emb_dim = hidden_dim = 32"
    bf16, f32 = jnp.bfloat16, jnp.float32

    # block-diagonal node_emb weight acting on [x_row | x_col]
    wn_blk = jnp.zeros((2 * emb, 2 * h), f32)
    wn_blk = wn_blk.at[:emb, :h].set(p["wn"]).at[emb:, h:].set(p["wn"])
    bn2 = jnp.concatenate([p["bn"], p["bn"]], axis=-1)                 # (1, 2h)

    ws1_node = p["ws1"][: 2 * h, :]                                    # rows for [nar|nac]
    ws1_edge = p["ws1"][2 * h:, :]                                     # rows for edge_attr

    # fold node_emb (bare Linear) into score-MLP L1; fuse horizontally with edge_2D_emb
    wns1 = wn_blk @ ws1_node                                           # (2emb, 128)
    bs1f = p["bs1"] + bn2 @ ws1_node                                   # (1, 128)
    wcat = jnp.concatenate([wns1, p["w2d"]], axis=-1)                  # (2emb, 128 + h)

    # fold coff_mlp (bare Linear) into project L1
    wp1_ang = p["wp1"][:2]                                             # (2, h)
    wp1_emb = p["wp1"][2:]                                             # (2h, h)
    wfold = jnp.concatenate(
        [p["wcoff"] @ wp1_emb[:h, :], p["wcoff"] @ wp1_emb[h:, :]], axis=0)   # (8h, h)
    bp1f = p["bp1"] + p["bcoff"] @ wp1_emb[:h, :] + p["bcoff"] @ wp1_emb[h:, :]

    wgf2pi = p["wgf"] * TWO_PI                                         # bake 2*pi in

    return [
        wcat.astype(bf16), p["b2d"].astype(f32),
        wgf2pi.astype(f32),
        wfold.astype(bf16),
        wp1_ang.astype(f32), bp1f.astype(f32),
        p["wp2"].astype(bf16), p["bp2"].astype(f32),
        ws1_edge.astype(bf16), bs1f.astype(f32),
        p["ws2"].astype(bf16), p["bs2"].astype(f32),
    ]


# --------------------------------------------------------------------------
# Plain-JAX glue (gathers, 3-vector geometry, SDE, scatter)
# --------------------------------------------------------------------------
def coord2basis(pos, row, col):
    coord_diff = pos[row] - pos[col]
    radial = jnp.sum(coord_diff ** 2, axis=1, keepdims=True)
    coord_cross = jnp.cross(pos[row], pos[col])
    norm = jnp.sqrt(radial) + EPSILON
    coord_diff = coord_diff / norm
    cross_norm = jnp.sqrt(jnp.sum(coord_cross ** 2, axis=1, keepdims=True)) + EPSILON
    coord_cross = coord_cross / cross_norm
    coord_vertical = jnp.cross(coord_diff, coord_cross)
    return coord_diff, coord_cross, coord_vertical


def _round_up(x, m):
    return ((x + m - 1) // m) * m


def _choose_tile(e):
    """Largest tile with <=12.5% padding, preferring >=2 grid steps (v7x: 2 TCs/chip)."""
    candidates = (2048, 1024, 512, 256, 128, 64, 32, 16, 8)
    for te in candidates:
        e_pad = _round_up(e, te)
        if (e_pad - e) * 8 <= e and e_pad // te >= 2:
            return te
    for te in candidates:
        e_pad = _round_up(e, te)
        if (e_pad - e) * 8 <= e:
            return te
    return 8


def _pad_rows(a, n_pad):
    if n_pad == 0:
        return a
    return jnp.pad(a, ((0, n_pad), (0, 0)))


def sde_model_forward(params, kernel_weights, node_2D_repr, data, anneal_power, rng):
    pos = data["positions"]
    node2graph = data["batch"]
    row, col = data["edge_index"][0], data["edge_index"][1]
    num_graphs = data["num_graphs"]
    n_nodes = pos.shape[0]

    T = params["num_diffusion_timesteps"]
    sigma_min, sigma_max = params["sigma_min"], params["sigma_max"]

    k_noise, k_t = jax.random.split(rng)
    pos_noise = jax.random.normal(k_noise, pos.shape, jnp.float32)
    half = num_graphs // 2 + 1
    t_half = jax.random.randint(k_t, (half,), 0, T)
    time_step = jnp.concatenate([t_half, T - t_half - 1], axis=0)[:num_graphs]

    # SDE_type == 'VE'
    time_step = time_step.astype(jnp.float32) / T * (1 - EPSILON) + EPSILON
    t_pos = time_step[node2graph]
    std_pos = sigma_min * (sigma_max / sigma_min) ** t_pos          # VESDE marginal std
    pos_perturbed = pos + std_pos[:, None] * pos_noise

    # ---- per-edge geometry (3-vectors) ----
    coord_diff, coord_cross, coord_vertical = coord2basis(pos_perturbed, row, col)
    edge_basis = jnp.stack([coord_diff, coord_cross, coord_vertical], axis=1)   # (E,3,3)
    r_i, r_j = pos_perturbed[row], pos_perturbed[col]
    coff_i = jnp.einsum("ebk,ek->eb", edge_basis, r_i)
    coff_j = jnp.einsum("ebk,ek->eb", edge_basis, r_j)
    coff_i = coff_i.at[:, 1].set(jnp.abs(coff_i[:, 1]))
    coff_j = coff_j.at[:, 1].set(jnp.abs(coff_j[:, 1]))
    coff_mul = coff_i * coff_j
    coff_i_norm = jnp.linalg.norm(coff_i, axis=-1, keepdims=True)
    coff_j_norm = jnp.linalg.norm(coff_j, axis=-1, keepdims=True)
    pseudo_cos = (coff_mul.sum(-1, keepdims=True)
                  / (coff_i_norm + EPSILON) / (coff_j_norm + EPSILON))
    pseudo_sin = jnp.sqrt(jnp.maximum(1.0 - pseudo_cos ** 2, 0.0))   # NaN guard

    e = row.shape[0]
    zeros_e = lambda k: jnp.zeros((e, k), jnp.float32)

    # ---- gathers + embedding lookup (glue) ----
    xr, xc = node_2D_repr[row], node_2D_repr[col]
    ea = params["edge_emb_table"][data["edge_attr"]]

    # ---- one lane-dense (E,128) input slab for the kernel ----
    slab = jnp.concatenate(
        [
            xr, xc, ea,
            coff_i[:, 0:1], coff_i[:, 2:3], coff_j[:, 0:1], coff_j[:, 2:3],
            pseudo_sin, pseudo_cos, zeros_e(2),
            coord_diff, zeros_e(5),
            coord_cross, zeros_e(5),
            coord_vertical, zeros_e(5),
        ],
        axis=-1,
    )  # (E, 128)

    # ---- fused per-edge hot path (Pallas) ----
    te = _choose_tile(e)
    e_pad = _round_up(e, te)
    slab_p = _pad_rows(slab, e_pad - e)
    out = edge_fuse(slab_p, kernel_weights, te)
    grad_e = out[:e, :3]

    # ---- scatter to nodes ----
    scores = jax.ops.segment_sum(grad_e, row, num_segments=n_nodes)

    # ---- loss ----
    if anneal_power == 0:
        loss_pos = jnp.sum((scores - pos_noise) ** 2, axis=-1)
    else:
        annealed_std = (std_pos ** anneal_power)[:, None]
        loss_pos = jnp.sum((scores - pos_noise) ** 2 * annealed_std, axis=-1)
    graph_sum = jax.ops.segment_sum(loss_pos, node2graph, num_segments=num_graphs)
    graph_cnt = jax.ops.segment_sum(jnp.ones_like(loss_pos), node2graph,
                                    num_segments=num_graphs)
    loss_pos = graph_sum / jnp.maximum(graph_cnt, 1.0)              # scatter_mean
    return {"position": loss_pos.mean()}


# --------------------------------------------------------------------------
# Deterministic parameter / data construction
# --------------------------------------------------------------------------
def linear_params(key, fan_in, fan_out):
    kw, kb = jax.random.split(key)
    lim = 1.0 / np.sqrt(fan_in)
    w = jax.random.uniform(kw, (fan_in, fan_out), jnp.float32, -lim, lim)
    b = jax.random.uniform(kb, (1, fan_out), jnp.float32, -lim, lim)
    return w, b


if __name__ == "__main__":
    emb_dim, hidden_dim = 32, 32
    hidden_coff_dim = 128
    num_nodes, num_graphs = 16, 2
    num_diffusion_timesteps = 1000
    beta_min, beta_max = 0.1, 1.0
    anneal_power = 2.0

    root = jax.random.PRNGKey(0)
    ks = jax.random.split(root, 16)

    wn, bn = linear_params(ks[0], emb_dim, hidden_dim)                 # node_emb
    w2d, b2d = linear_params(ks[1], 2 * emb_dim, hidden_dim)           # edge_2D_emb
    edge_emb_table = jax.random.normal(ks[2], (100, hidden_dim), jnp.float32)
    wgf = jax.random.normal(ks[3], (1, hidden_dim), jnp.float32)       # Fourier W (scale=1)
    wcoff, bcoff = linear_params(ks[4], 4 * hidden_dim, hidden_dim)    # coff_mlp
    wp1, bp1 = linear_params(ks[5], 2 * hidden_dim + 2, hidden_dim)    # project L1
    wp2, bp2 = linear_params(ks[6], hidden_dim, hidden_dim)            # project L2
    ws1, bs1 = linear_params(ks[7], 3 * hidden_dim, hidden_coff_dim)   # score MLP L1
    ws2_3, bs2_3 = linear_params(ks[8], hidden_coff_dim, 3)            # score MLP L2
    ws2 = jnp.pad(ws2_3, ((0, 0), (0, 5)))                             # pad 3 -> 8 lanes
    bs2 = jnp.pad(bs2_3, ((0, 0), (0, 5)))

    params = dict(
        wn=wn, bn=bn, w2d=w2d, b2d=b2d, edge_emb_table=edge_emb_table, wgf=wgf,
        wcoff=wcoff, bcoff=bcoff, wp1=wp1, bp1=bp1, wp2=wp2, bp2=bp2,
        ws1=ws1, bs1=bs1, ws2=ws2, bs2=bs2,
        num_diffusion_timesteps=num_diffusion_timesteps,
        sigma_min=beta_min, sigma_max=beta_max,
    )
    kernel_weights = build_kernel_weights(params)

    # synthetic graph batch: 2 graphs x 8 nodes, 3 out-edges per node -> E = 48
    rows, cols = [], []
    for g in range(num_graphs):
        base = g * 8
        for i in range(8):
            for d in (1, 2, 3):
                rows.append(base + i)
                cols.append(base + (i + d) % 8)
    edge_index = jnp.array([rows, cols], jnp.int32)

    node_2D_repr = jax.random.normal(ks[9], (num_nodes, emb_dim), jnp.float32)
    positions = jax.random.normal(ks[10], (num_nodes, 3), jnp.float32)
    batch = jnp.repeat(jnp.arange(num_graphs, dtype=jnp.int32), 8)
    edge_attr = jax.random.randint(ks[11], (edge_index.shape[1],), 0, 100)

    data = dict(
        positions=positions, batch=batch, edge_index=edge_index,
        edge_attr=edge_attr, num_graphs=num_graphs,
    )

    loss_dict = sde_model_forward(params, kernel_weights, node_2D_repr, data,
                                  anneal_power, ks[12])
    jax.block_until_ready(loss_dict["position"])
    print("KERNEL_OK")
</pallas_src>

<mosaic_0001>
module attributes {stable_mosaic.version = 11 : i64} {
  func.func @edge_fuse_kernel(%arg0: i32, %arg1: memref<16x128xf32, #tpu.memory_space<vmem>>, %arg2: memref<64x160xbf16, #tpu.memory_space<vmem>>, %arg3: memref<1x32xf32, #tpu.memory_space<vmem>>, %arg4: memref<1x32xf32, #tpu.memory_space<vmem>>, %arg5: memref<256x32xbf16, #tpu.memory_space<vmem>>, %arg6: memref<2x32xf32, #tpu.memory_space<vmem>>, %arg7: memref<1x32xf32, #tpu.memory_space<vmem>>, %arg8: memref<32x32xbf16, #tpu.memory_space<vmem>>, %arg9: memref<1x32xf32, #tpu.memory_space<vmem>>, %arg10: memref<32x128xbf16, #tpu.memory_space<vmem>>, %arg11: memref<1x128xf32, #tpu.memory_space<vmem>>, %arg12: memref<128x8xbf16, #tpu.memory_space<vmem>>, %arg13: memref<1x8xf32, #tpu.memory_space<vmem>>, %arg14: memref<16x8xf32, #tpu.memory_space<vmem>>) attributes {dimension_semantics = [#tpu.dimension_semantics<parallel>], iteration_bounds = array<i64: 3>, scalar_prefetch = 0 : i64, scratch_operands = 0 : i64, tpu.core_type = #tpu.core_type<tc>, window_params = [{transform_indices = @transform_0, window_bounds = array<i64: 16, 128>}, {pipeline_mode = #tpu.pipeline_mode<synchronous>, transform_indices = @transform_1, window_bounds = array<i64: 64, 160>}, {pipeline_mode = #tpu.pipeline_mode<synchronous>, transform_indices = @transform_2, window_bounds = array<i64: 1, 32>}, {pipeline_mode = #tpu.pipeline_mode<synchronous>, transform_indices = @transform_3, window_bounds = array<i64: 1, 32>}, {pipeline_mode = #tpu.pipeline_mode<synchronous>, transform_indices = @transform_4, window_bounds = array<i64: 256, 32>}, {pipeline_mode = #tpu.pipeline_mode<synchronous>, transform_indices = @transform_5, window_bounds = array<i64: 2, 32>}, {pipeline_mode = #tpu.pipeline_mode<synchronous>, transform_indices = @transform_6, window_bounds = array<i64: 1, 32>}, {pipeline_mode = #tpu.pipeline_mode<synchronous>, transform_indices = @transform_7, window_bounds = array<i64: 32, 32>}, {pipeline_mode = #tpu.pipeline_mode<synchronous>, transform_indices = @transform_8, window_bounds = array<i64: 1, 32>}, {pipeline_mode = #tpu.pipeline_mode<synchronous>, transform_indices = @transform_9, window_bounds = array<i64: 32, 128>}, {pipeline_mode = #tpu.pipeline_mode<synchronous>, transform_indices = @transform_10, window_bounds = array<i64: 1, 128>}, {pipeline_mode = #tpu.pipeline_mode<synchronous>, transform_indices = @transform_11, window_bounds = array<i64: 128, 8>}, {pipeline_mode = #tpu.pipeline_mode<synchronous>, transform_indices = @transform_12, window_bounds = array<i64: 1, 8>}, {transform_indices = @transform_13, window_bounds = array<i64: 16, 8>}]} {
    %c0 = arith.constant 0 : index
    %c0_0 = arith.constant 0 : index
    %0 = vector.load %arg1[%c0, %c0_0] : memref<16x128xf32, #tpu.memory_space<vmem>>, vector<16x128xf32>
    %1 = vector.extract_strided_slice %0 {offsets = [0, 0], sizes = [16, 64], strides = [1, 1]} : vector<16x128xf32> to vector<16x64xf32>
    %2 = arith.truncf %1 : vector<16x64xf32> to vector<16x64xbf16>
    %3 = vector.extract_strided_slice %0 {offsets = [0, 64], sizes = [16, 32], strides = [1, 1]} : vector<16x128xf32> to vector<16x32xf32>
    %c0_1 = arith.constant 0 : index
    %c0_2 = arith.constant 0 : index
    %4 = vector.load %arg2[%c0_1, %c0_2] : memref<64x160xbf16, #tpu.memory_space<vmem>>, vector<64x160xbf16>
    %cst = arith.constant dense<0.000000e+00> : vector<16x160xf32>
    %5 = tpu.matmul %2, %4, %cst {dimension_numbers = #tpu.dot_dimension_numbers<[1], [0], [0], [1], [0, 0, 1, 1], [], []>} : vector<16x64xbf16>, vector<64x160xbf16>, vector<16x160xf32> -> vector<16x160xf32>
    %6 = vector.extract_strided_slice %5 {offsets = [0, 0], sizes = [16, 128], strides = [1, 1]} : vector<16x160xf32> to vector<16x128xf32>
    %7 = vector.extract_strided_slice %5 {offsets = [0, 128], sizes = [16, 32], strides = [1, 1]} : vector<16x160xf32> to vector<16x32xf32>
    %c0_3 = arith.constant 0 : index
    %c0_4 = arith.constant 0 : index
    %8 = vector.load %arg3[%c0_3, %c0_4] : memref<1x32xf32, #tpu.memory_space<vmem>>, vector<1x32xf32>
    %9 = vector.broadcast %8 : vector<1x32xf32> to vector<16x32xf32>
    %10 = arith.addf %7, %9 : vector<16x32xf32>
    %11 = arith.addf %10, %3 : vector<16x32xf32>
    %c0_5 = arith.constant 0 : index
    %c0_6 = arith.constant 0 : index
    %12 = vector.load %arg4[%c0_5, %c0_6] : memref<1x32xf32, #tpu.memory_space<vmem>>, vector<1x32xf32>
    %13 = vector.extract_strided_slice %0 {offsets = [0, 96], sizes = [16, 1], strides = [1, 1]} : vector<16x128xf32> to vector<16x1xf32>
    %14 = vector.broadcast %13 : vector<16x1xf32> to vector<16x32xf32>
    %15 = vector.broadcast %12 : vector<1x32xf32> to vector<16x32xf32>
    %16 = arith.mulf %14, %15 : vector<16x32xf32>
    %17 = vector.extract_strided_slice %0 {offsets = [0, 97], sizes = [16, 1], strides = [1, 1]} : vector<16x128xf32> to vector<16x1xf32>
    %18 = vector.broadcast %17 : vector<16x1xf32> to vector<16x32xf32>
    %19 = vector.broadcast %12 : vector<1x32xf32> to vector<16x32xf32>
    %20 = arith.mulf %18, %19 : vector<16x32xf32>
    %21 = vector.extract_strided_slice %0 {offsets = [0, 98], sizes = [16, 1], strides = [1, 1]} : vector<16x128xf32> to vector<16x1xf32>
    %22 = vector.broadcast %21 : vector<16x1xf32> to vector<16x32xf32>
    %23 = vector.broadcast %12 : vector<1x32xf32> to vector<16x32xf32>
    %24 = arith.mulf %22, %23 : vector<16x32xf32>
    %25 = vector.extract_strided_slice %0 {offsets = [0, 99], sizes = [16, 1], strides = [1, 1]} : vector<16x128xf32> to vector<16x1xf32>
    %26 = vector.broadcast %25 : vector<16x1xf32> to vector<16x32xf32>
    %27 = vector.broadcast %12 : vector<1x32xf32> to vector<16x32xf32>
    %28 = arith.mulf %26, %27 : vector<16x32xf32>
    %cst_7 = arith.constant 1.57079637 : f32
    %29 = vector.broadcast %cst_7 : f32 to vector<16x32xf32>
    %30 = arith.addf %16, %29 : vector<16x32xf32>
    %cst_8 = arith.constant 1.57079637 : f32
    %31 = vector.broadcast %cst_8 : f32 to vector<16x32xf32>
    %32 = arith.addf %20, %31 : vector<16x32xf32>
    %cst_9 = arith.constant 1.57079637 : f32
    %33 = vector.broadcast %cst_9 : f32 to vector<16x32xf32>
    %34 = arith.addf %24, %33 : vector<16x32xf32>
    %cst_10 = arith.constant 1.57079637 : f32
    %35 = vector.broadcast %cst_10 : f32 to vector<16x32xf32>
    %36 = arith.addf %28, %35 : vector<16x32xf32>
    %37 = tpu.concatenate %16, %30, %20, %32, %24, %34, %28, %36 in 1 : vector<16x32xf32>, vector<16x32xf32>, vector<16x32xf32>, vector<16x32xf32>, vector<16x32xf32>, vector<16x32xf32>, vector<16x32xf32>, vector<16x32xf32> -> vector<16x256xf32>
    %38 = math.sin %37 : vector<16x256xf32>
    %39 = arith.truncf %38 : vector<16x256xf32> to vector<16x256xbf16>
    %40 = vector.extract_strided_slice %0 {offsets = [0, 100], sizes = [16, 1], strides = [1, 1]} : vector<16x128xf32> to vector<16x1xf32>
    %41 = vector.extract_strided_slice %0 {offsets = [0, 101], sizes = [16, 1], strides = [1, 1]} : vector<16x128xf32> to vector<16x1xf32>
    %c0_11 = arith.constant 0 : index
    %c0_12 = arith.constant 0 : index
    %42 = vector.load %arg5[%c0_11, %c0_12] : memref<256x32xbf16, #tpu.memory_space<vmem>>, vector<256x32xbf16>
    %cst_13 = arith.constant dense<0.000000e+00> : vector<16x32xf32>
    %43 = tpu.matmul %39, %42, %cst_13 {dimension_numbers = #tpu.dot_dimension_numbers<[1], [0], [0], [1], [0, 0, 1, 1], [], []>} : vector<16x256xbf16>, vector<256x32xbf16>, vector<16x32xf32> -> vector<16x32xf32>
    %c0_14 = arith.constant 0 : index
    %c0_15 = arith.constant 0 : index
    %44 = vector.load %arg6[%c0_14, %c0_15] : memref<2x32xf32, #tpu.memory_space<vmem>>, vector<1x32xf32>
    %45 = vector.broadcast %40 : vector<16x1xf32> to vector<16x32xf32>
    %46 = vector.broadcast %44 : vector<1x32xf32> to vector<16x32xf32>
    %47 = arith.mulf %45, %46 : vector<16x32xf32>
    %48 = arith.addf %43, %47 : vector<16x32xf32>
    %c1 = arith.constant 1 : index
    %c0_16 = arith.constant 0 : index
    %49 = vector.load %arg6[%c1, %c0_16] : memref<2x32xf32, #tpu.memory_space<vmem>>, vector<1x32xf32>
    %50 = vector.broadcast %41 : vector<16x1xf32> to vector<16x32xf32>
    %51 = vector.broadcast %49 : vector<1x32xf32> to vector<16x32xf32>
    %52 = arith.mulf %50, %51 : vector<16x32xf32>
    %53 = arith.addf %48, %52 : vector<16x32xf32>
    %c0_17 = arith.constant 0 : index
    %c0_18 = arith.constant 0 : index
    %54 = vector.load %arg7[%c0_17, %c0_18] : memref<1x32xf32, #tpu.memory_space<vmem>>, vector<1x32xf32>
    %55 = vector.broadcast %54 : vector<1x32xf32> to vector<16x32xf32>
    %56 = arith.addf %53, %55 : vector<16x32xf32>
    %57 = arith.negf %56 : vector<16x32xf32>
    %58 = math.exp %57 : vector<16x32xf32>
    %cst_19 = arith.constant 1.000000e+00 : f32
    %59 = vector.broadcast %cst_19 : f32 to vector<16x32xf32>
    %60 = arith.addf %59, %58 : vector<16x32xf32>
    %61 = arith.divf %59, %60 : vector<16x32xf32>
    %62 = arith.mulf %56, %61 : vector<16x32xf32>
    %63 = arith.truncf %62 : vector<16x32xf32> to vector<16x32xbf16>
    %c0_20 = arith.constant 0 : index
    %c0_21 = arith.constant 0 : index
    %64 = vector.load %arg8[%c0_20, %c0_21] : memref<32x32xbf16, #tpu.memory_space<vmem>>, vector<32x32xbf16>
    %cst_22 = arith.constant dense<0.000000e+00> : vector<16x32xf32>
    %65 = tpu.matmul %63, %64, %cst_22 {dimension_numbers = #tpu.dot_dimension_numbers<[1], [0], [0], [1], [0, 0, 1, 1], [], []>} : vector<16x32xbf16>, vector<32x32xbf16>, vector<16x32xf32> -> vector<16x32xf32>
    %c0_23 = arith.constant 0 : index
    %c0_24 = arith.constant 0 : index
    %66 = vector.load %arg9[%c0_23, %c0_24] : memref<1x32xf32, #tpu.memory_space<vmem>>, vector<1x32xf32>
    %67 = vector.broadcast %66 : vector<1x32xf32> to vector<16x32xf32>
    %68 = arith.addf %65, %67 : vector<16x32xf32>
    %69 = arith.addf %11, %68 : vector<16x32xf32>
    %70 = arith.truncf %69 : vector<16x32xf32> to vector<16x32xbf16>
    %c0_25 = arith.constant 0 : index
    %c0_26 = arith.constant 0 : index
    %71 = vector.load %arg10[%c0_25, %c0_26] : memref<32x128xbf16, #tpu.memory_space<vmem>>, vector<32x128xbf16>
    %cst_27 = arith.constant dense<0.000000e+00> : vector<16x128xf32>
    %72 = tpu.matmul %70, %71, %cst_27 {dimension_numbers = #tpu.dot_dimension_numbers<[1], [0], [0], [1], [0, 0, 1, 1], [], []>} : vector<16x32xbf16>, vector<32x128xbf16>, vector<16x128xf32> -> vector<16x128xf32>
    %73 = arith.addf %6, %72 : vector<16x128xf32>
    %c0_28 = arith.constant 0 : index
    %c0_29 = arith.constant 0 : index
    %74 = vector.load %arg11[%c0_28, %c0_29] : memref<1x128xf32, #tpu.memory_space<vmem>>, vector<1x128xf32>
    %75 = vector.broadcast %74 : vector<1x128xf32> to vector<16x128xf32>
    %76 = arith.addf %73, %75 : vector<16x128xf32>
    %77 = arith.negf %76 : vector<16x128xf32>
    %78 = math.exp %77 : vector<16x128xf32>
    %cst_30 = arith.constant 1.000000e+00 : f32
    %79 = vector.broadcast %cst_30 : f32 to vector<16x128xf32>
    %80 = arith.addf %79, %78 : vector<16x128xf32>
    %81 = arith.divf %79, %80 : vector<16x128xf32>
    %82 = arith.mulf %76, %81 : vector<16x128xf32>
    %83 = arith.truncf %82 : vector<16x128xf32> to vector<16x128xbf16>
    %c0_31 = arith.constant 0 : index
    %c0_32 = arith.constant 0 : index
    %84 = vector.load %arg12[%c0_31, %c0_32] : memref<128x8xbf16, #tpu.memory_space<vmem>>, vector<128x8xbf16>
    %cst_33 = arith.constant dense<0.000000e+00> : vector<16x8xf32>
    %85 = tpu.matmul %83, %84, %cst_33 {dimension_numbers = #tpu.dot_dimension_numbers<[1], [0], [0], [1], [0, 0, 1, 1], [], []>} : vector<16x128xbf16>, vector<128x8xbf16>, vector<16x8xf32> -> vector<16x8xf32>
    %c0_34 = arith.constant 0 : index
    %c0_35 = arith.constant 0 : index
    %86 = vector.load %arg13[%c0_34, %c0_35] : memref<1x8xf32, #tpu.memory_space<vmem>>, vector<1x8xf32>
    %87 = vector.broadcast %86 : vector<1x8xf32> to vector<16x8xf32>
    %88 = arith.addf %85, %87 : vector<16x8xf32>
    %89 = vector.extract_strided_slice %88 {offsets = [0, 0], sizes = [16, 1], strides = [1, 1]} : vector<16x8xf32> to vector<16x1xf32>
    %90 = vector.extract_strided_slice %0 {offsets = [0, 104], sizes = [16, 8], strides = [1, 1]} : vector<16x128xf32> to vector<16x8xf32>
    %91 = vector.broadcast %89 : vector<16x1xf32> to vector<16x8xf32>
    %92 = arith.mulf %91, %90 : vector<16x8xf32>
    %93 = vector.extract_strided_slice %88 {offsets = [0, 1], sizes = [16, 1], strides = [1, 1]} : vector<16x8xf32> to vector<16x1xf32>
    %94 = vector.extract_strided_slice %0 {offsets = [0, 112], sizes = [16, 8], strides = [1, 1]} : vector<16x128xf32> to vector<16x8xf32>
    %95 = vector.broadcast %93 : vector<16x1xf32> to vector<16x8xf32>
    %96 = arith.mulf %95, %94 : vector<16x8xf32>
    %97 = arith.addf %92, %96 : vector<16x8xf32>
    %98 = vector.extract_strided_slice %88 {offsets = [0, 2], sizes = [16, 1], strides = [1, 1]} : vector<16x8xf32> to vector<16x1xf32>
    %99 = vector.extract_strided_slice %0 {offsets = [0, 120], sizes = [16, 8], strides = [1, 1]} : vector<16x128xf32> to vector<16x8xf32>
    %100 = vector.broadcast %98 : vector<16x1xf32> to vector<16x8xf32>
    %101 = arith.mulf %100, %99 : vector<16x8xf32>
    %102 = arith.addf %97, %101 : vector<16x8xf32>
    %c0_36 = arith.constant 0 : index
    %c0_37 = arith.constant 0 : index
    %103 = vector.load %arg14[%c0_36, %c0_37] : memref<16x8xf32, #tpu.memory_space<vmem>>, vector<16x8xf32>
    tpu.vector_store %arg14[%c0_36, %c0_37], %102 {strides = array<i32>} : memref<16x8xf32, #tpu.memory_space<vmem>>, vector<16x8xf32>,
    return
  }
  func.func @transform_0(%arg0: i32) -> (i32, i32) {
    %c0_i32 = arith.constant 0 : i32
    %c0_i32_0 = arith.constant 0 : i32
    return %arg0, %c0_i32 : i32, i32
  }
  func.func @transform_1(%arg0: i32) -> (i32, i32) {
    %c0_i32 = arith.constant 0 : i32
    %c0_i32_0 = arith.constant 0 : i32
    %c0_i32_1 = arith.constant 0 : i32
    return %c0_i32, %c0_i32_0 : i32, i32
  }
  func.func @transform_2(%arg0: i32) -> (i32, i32) {
    %c0_i32 = arith.constant 0 : i32
    %c0_i32_0 = arith.constant 0 : i32
    %c0_i32_1 = arith.constant 0 : i32
    return %c0_i32, %c0_i32_0 : i32, i32
  }
  func.func @transform_3(%arg0: i32) -> (i32, i32) {
    %c0_i32 = arith.constant 0 : i32
    %c0_i32_0 = arith.constant 0 : i32
    %c0_i32_1 = arith.constant 0 : i32
    return %c0_i32, %c0_i32_0 : i32, i32
  }
  func.func @transform_4(%arg0: i32) -> (i32, i32) {
    %c0_i32 = arith.constant 0 : i32
    %c0_i32_0 = arith.constant 0 : i32
    %c0_i32_1 = arith.constant 0 : i32
    return %c0_i32, %c0_i32_0 : i32, i32
  }
  func.func @transform_5(%arg0: i32) -> (i32, i32) {
    %c0_i32 = arith.constant 0 : i32
    %c0_i32_0 = arith.constant 0 : i32
    %c0_i32_1 = arith.constant 0 : i32
    return %c0_i32, %c0_i32_0 : i32, i32
  }
  func.func @transform_6(%arg0: i32) -> (i32, i32) {
    %c0_i32 = arith.constant 0 : i32
    %c0_i32_0 = arith.constant 0 : i32
    %c0_i32_1 = arith.constant 0 : i32
    return %c0_i32, %c0_i32_0 : i32, i32
  }
  func.func @transform_7(%arg0: i32) -> (i32, i32) {
    %c0_i32 = arith.constant 0 : i32
    %c0_i32_0 = arith.constant 0 : i32
    %c0_i32_1 = arith.constant 0 : i32
    return %c0_i32, %c0_i32_0 : i32, i32
  }
  func.func @transform_8(%arg0: i32) -> (i32, i32) {
    %c0_i32 = arith.constant 0 : i32
    %c0_i32_0 = arith.constant 0 : i32
    %c0_i32_1 = arith.constant 0 : i32
    return %c0_i32, %c0_i32_0 : i32, i32
  }
  func.func @transform_9(%arg0: i32) -> (i32, i32) {
    %c0_i32 = arith.constant 0 : i32
    %c0_i32_0 = arith.constant 0 : i32
    %c0_i32_1 = arith.constant 0 : i32
    return %c0_i32, %c0_i32_0 : i32, i32
  }
  func.func @transform_10(%arg0: i32) -> (i32, i32) {
    %c0_i32 = arith.constant 0 : i32
    %c0_i32_0 = arith.constant 0 : i32
    %c0_i32_1 = arith.constant 0 : i32
    return %c0_i32, %c0_i32_0 : i32, i32
  }
  func.func @transform_11(%arg0: i32) -> (i32, i32) {
    %c0_i32 = arith.constant 0 : i32
    %c0_i32_0 = arith.constant 0 : i32
    %c0_i32_1 = arith.constant 0 : i32
    return %c0_i32, %c0_i32_0 : i32, i32
  }
  func.func @transform_12(%arg0: i32) -> (i32, i32) {
    %c0_i32 = arith.constant 0 : i32
    %c0_i32_0 = arith.constant 0 : i32
    %c0_i32_1 = arith.constant 0 : i32
    return %c0_i32, %c0_i32_0 : i32, i32
  }
  func.func @transform_13(%arg0: i32) -> (i32, i32) {
    %c0_i32 = arith.constant 0 : i32
    %c0_i32_0 = arith.constant 0 : i32
    return %arg0, %c0_i32 : i32, i32
  }
}

</mosaic_0001>

<llo_original>
// kernel: tpu_custom_call.1
$region0: #{tpu_custom_call.1}
  #allocation0 [shape = 'u32[]', space=smem, size = 0x4, offset = 0x4, fixed_abs, tag = 'smem constant byte address 0x4 - core index']
  #allocation1 [shape = 'u32[72,128]{1,0:T(1,128)}', space=vmem, size = 0x9000, scoped, tag = 'internal scratch']
  %s0 = inlined_call_operand.vmem [shape: f32[48,128], index: 0, kind: input, shape index: {}]
  %s1 = inlined_call_operand.vmem [shape: bf16[64,160], index: 1, kind: input, shape index: {}]
  %s2 = inlined_call_operand.vmem [shape: f32[1,32], index: 2, kind: input, shape index: {}]
  %s3 = inlined_call_operand.vmem [shape: f32[1,32], index: 3, kind: input, shape index: {}]
  %s4 = inlined_call_operand.vmem [shape: bf16[256,32], index: 4, kind: input, shape index: {}]
  %s5 = inlined_call_operand.vmem [shape: f32[2,32], index: 5, kind: input, shape index: {}]
  %s6 = inlined_call_operand.vmem [shape: f32[1,32], index: 6, kind: input, shape index: {}]
  %s7 = inlined_call_operand.vmem [shape: bf16[32,32], index: 7, kind: input, shape index: {}]
  %s8 = inlined_call_operand.vmem [shape: f32[1,32], index: 8, kind: input, shape index: {}]
  %s9 = inlined_call_operand.vmem [shape: bf16[32,128], index: 9, kind: input, shape index: {}]
  %s10 = inlined_call_operand.vmem [shape: f32[1,128], index: 10, kind: input, shape index: {}]
  %s11 = inlined_call_operand.vmem [shape: bf16[128,8], index: 11, kind: input, shape index: {}]
  %s12 = inlined_call_operand.vmem [shape: f32[1,8], index: 12, kind: input, shape index: {}]
  %s13 = inlined_call_operand.vmem [shape: f32[48,8], index: 13, kind: output, shape index: {}]
  %s14 = sld [smem:[#allocation0]]
  $region85: #{tpu_custom_call.1} parent=0
    _
  %s16 = ssub.s32 1, %s14
  %s17 = scalar_select 0, %s16, %s14
  loop: start=0, step=1, limit=5
  $region2: #{tpu_custom_call.1} parent=0 // loop_pre_header
    _
  $region3: #{tpu_custom_call.1} parent=0 // loop_header
    %s19 = sphi 0, %s23
    %p20 = scmp.ge.s32.totalorder %s19, 5
    %s29 = sphi 0, %s31
    %s32 = sphi 0, %s29
    %s33 = sphi 0, %s32
    %s49 = sphi 0, %s33
    %s53 = sphi 0, %s53
    %s55 = sphi 0, %s53
    %s56 = sphi 0, %s55
    %s70 = sphi 0, %s56
    %s74 = sphi 0, %s74
    %s76 = sphi 0, %s74
    %s77 = sphi 0, %s76
    %s91 = sphi 0, %s77
    %s95 = sphi 0, %s95
    %s97 = sphi 0, %s95
    %s98 = sphi 0, %s97
    %s112 = sphi 0, %s98
    %s116 = sphi 0, %s116
    %s118 = sphi 0, %s116
    %s119 = sphi 0, %s118
    %s133 = sphi 0, %s119
    %s137 = sphi 0, %s137
    %s139 = sphi 0, %s137
    %s140 = sphi 0, %s139
    %s154 = sphi 0, %s140
    %s158 = sphi 0, %s158
    %s160 = sphi 0, %s158
    %s161 = sphi 0, %s160
    %s175 = sphi 0, %s161
    %s179 = sphi 0, %s179
    %s181 = sphi 0, %s179
    %s182 = sphi 0, %s181
    %s196 = sphi 0, %s182
    %s200 = sphi 0, %s200
    %s202 = sphi 0, %s200
    %s203 = sphi 0, %s202
    %s217 = sphi 0, %s203
    %s221 = sphi 0, %s221
    %s223 = sphi 0, %s221
    %s224 = sphi 0, %s223
    %s238 = sphi 0, %s224
    %s242 = sphi 0, %s242
    %s244 = sphi 0, %s242
    %s245 = sphi 0, %s244
    %s259 = sphi 0, %s245
    %s263 = sphi 0, %s263
    %s265 = sphi 0, %s263
    %s266 = sphi 0, %s265
    %s280 = sphi 0, %s266
    %s284 = sphi 0, %s284
    %s286 = sphi 0, %s284
    %s287 = sphi 0, %s286
    %s301 = sphi 0, %s287
    %s307 = sphi 0, %s309
    %s310 = sphi 0, %s307
    %s311 = sphi 0, %s310
    %s327 = sphi 0, %s311
  $region4: #{tpu_custom_call.1} parent=0 // loop_header_branch
    %22 = sbr.rel (%p20) target = $region8
  $region5: #{tpu_custom_call.1} parent=0 // loop_body
    %s24 = ssub.s32 %s19, 1
    %s25 = ssub.s32 %s19, 2
    %s26 = sadd.s32 %s19, 1
    %s27 = ssub.s32 %s19, %s26
    %p28 = scmp.eq.s32.totalorder %s27, 0
    %s30 = sadd.s32 %s29, 1
    %s31 = scalar_select %p28, %s29, %s30
    %p34 = pneg %p28
    %p35 = scmp.eq.s32.totalorder %s19, 2
    %p36 = por %p34, %p35
    %p37 = scmp.ne.s32.totalorder %s29, %s32
    %p38 = scmp.eq.s32.totalorder %s19, 0
    %p39 = por %p37, %p38
    %p40 = scmp.ne.s32.totalorder %s29, %s32
    %p41 = scmp.eq.s32.totalorder %s24, 2
    %p42 = por %p40, %p41
    %p43 = scmp.ne.s32.totalorder %s32, %s33
    %p44 = scmp.eq.s32.totalorder %s24, 0
    %p45 = por %p43, %p44
    %p46 = scmp.ne.s32.totalorder %s32, %s33
    %p47 = scmp.eq.s32.totalorder %s25, 2
    %p48 = por %p46, %p47
    %p50 = scmp.ne.s32.totalorder %s33, %s49
    %p51 = scmp.eq.s32.totalorder %s25, 0
    %p52 = por %p50, %p51
    %s54 = sadd.s32 %s53, 1
    %p57 = scmp.eq.s32.totalorder %s19, 2
    %p58 = scmp.ne.s32.totalorder %s53, %s55
    %p59 = scmp.eq.s32.totalorder %s19, 0
    %p60 = por %p58, %p59
    %p61 = scmp.ne.s32.totalorder %s53, %s55
    %p62 = scmp.eq.s32.totalorder %s24, 2
    %p63 = por %p61, %p62
    %p64 = scmp.ne.s32.totalorder %s55, %s56
    %p65 = scmp.eq.s32.totalorder %s24, 0
    %p66 = por %p64, %p65
    %p67 = scmp.ne.s32.totalorder %s55, %s56
    %p68 = scmp.eq.s32.totalorder %s25, 2
    %p69 = por %p67, %p68
    %p71 = scmp.ne.s32.totalorder %s56, %s70
    %p72 = scmp.eq.s32.totalorder %s25, 0
    %p73 = por %p71, %p72
    %s75 = sadd.s32 %s74, 1
    %p78 = scmp.eq.s32.totalorder %s19, 2
    %p79 = scmp.ne.s32.totalorder %s74, %s76
    %p80 = scmp.eq.s32.totalorder %s19, 0
    %p81 = por %p79, %p80
    %p82 = scmp.ne.s32.totalorder %s74, %s76
    %p83 = scmp.eq.s32.totalorder %s24, 2
    %p84 = por %p82, %p83
    %p85 = scmp.ne.s32.totalorder %s76, %s77
    %p86 = scmp.eq.s32.totalorder %s24, 0
    %p87 = por %p85, %p86
    %p88 = scmp.ne.s32.totalorder %s76, %s77
    %p89 = scmp.eq.s32.totalorder %s25, 2
    %p90 = por %p88, %p89
    %p92 = scmp.ne.s32.totalorder %s77, %s91
    %p93 = scmp.eq.s32.totalorder %s25, 0
    %p94 = por %p92, %p93
    %s96 = sadd.s32 %s95, 1
    %p99 = scmp.eq.s32.totalorder %s19, 2
    %p100 = scmp.ne.s32.totalorder %s95, %s97
    %p101 = scmp.eq.s32.totalorder %s19, 0
    %p102 = por %p100, %p101
    %p103 = scmp.ne.s32.totalorder %s95, %s97
    %p104 = scmp.eq.s32.totalorder %s24, 2
    %p105 = por %p103, %p104
    %p106 = scmp.ne.s32.totalorder %s97, %s98
    %p107 = scmp.eq.s32.totalorder %s24, 0
    %p108 = por %p106, %p107
    %p109 = scmp.ne.s32.totalorder %s97, %s98
    %p110 = scmp.eq.s32.totalorder %s25, 2
    %p111 = por %p109, %p110
    %p113 = scmp.ne.s32.totalorder %s98, %s112
    %p114 = scmp.eq.s32.totalorder %s25, 0
    %p115 = por %p113, %p114
    %s117 = sadd.s32 %s116, 1
    %p120 = scmp.eq.s32.totalorder %s19, 2
    %p121 = scmp.ne.s32.totalorder %s116, %s118
    %p122 = scmp.eq.s32.totalorder %s19, 0
    %p123 = por %p121, %p122
    %p124 = scmp.ne.s32.totalorder %s116, %s118
    %p125 = scmp.eq.s32.totalorder %s24, 2
    %p126 = por %p124, %p125
    %p127 = scmp.ne.s32.totalorder %s118, %s119
    %p128 = scmp.eq.s32.totalorder %s24, 0
    %p129 = por %p127, %p128
    %p130 = scmp.ne.s32.totalorder %s118, %s119
    %p131 = scmp.eq.s32.totalorder %s25, 2
    %p132 = por %p130, %p131
    %p134 = scmp.ne.s32.totalorder %s119, %s133
    %p135 = scmp.eq.s32.totalorder %s25, 0
    %p136 = por %p134, %p135
    %s138 = sadd.s32 %s137, 1
    %p141 = scmp.eq.s32.totalorder %s19, 2
    %p142 = scmp.ne.s32.totalorder %s137, %s139
    %p143 = scmp.eq.s32.totalorder %s19, 0
    %p144 = por %p142, %p143
    %p145 = scmp.ne.s32.totalorder %s137, %s139
    %p146 = scmp.eq.s32.totalorder %s24, 2
    %p147 = por %p145, %p146
    %p148 = scmp.ne.s32.totalorder %s139, %s140
    %p149 = scmp.eq.s32.totalorder %s24, 0
    %p150 = por %p148, %p149
    %p151 = scmp.ne.s32.totalorder %s139, %s140
    %p152 = scmp.eq.s32.totalorder %s25, 2
    %p153 = por %p151, %p152
    %p155 = scmp.ne.s32.totalorder %s140, %s154
    %p156 = scmp.eq.s32.totalorder %s25, 0
    %p157 = por %p155, %p156
    %s159 = sadd.s32 %s158, 1
    %p162 = scmp.eq.s32.totalorder %s19, 2
    %p163 = scmp.ne.s32.totalorder %s158, %s160
    %p164 = scmp.eq.s32.totalorder %s19, 0
    %p165 = por %p163, %p164
    %p166 = scmp.ne.s32.totalorder %s158, %s160
    %p167 = scmp.eq.s32.totalorder %s24, 2
    %p168 = por %p166, %p167
    %p169 = scmp.ne.s32.totalorder %s160, %s161
    %p170 = scmp.eq.s32.totalorder %s24, 0
    %p171 = por %p169, %p170
    %p172 = scmp.ne.s32.totalorder %s160, %s161
    %p173 = scmp.eq.s32.totalorder %s25, 2
    %p174 = por %p172, %p173
    %p176 = scmp.ne.s32.totalorder %s161, %s175
    %p177 = scmp.eq.s32.totalorder %s25, 0
    %p178 = por %p176, %p177
    %s180 = sadd.s32 %s179, 1
    %p183 = scmp.eq.s32.totalorder %s19, 2
    %p184 = scmp.ne.s32.totalorder %s179, %s181
    %p185 = scmp.eq.s32.totalorder %s19, 0
    %p186 = por %p184, %p185
    %p187 = scmp.ne.s32.totalorder %s179, %s181
    %p188 = scmp.eq.s32.totalorder %s24, 2
    %p189 = por %p187, %p188
    %p190 = scmp.ne.s32.totalorder %s181, %s182
    %p191 = scmp.eq.s32.totalorder %s24, 0
    %p192 = por %p190, %p191
    %p193 = scmp.ne.s32.totalorder %s181, %s182
    %p194 = scmp.eq.s32.totalorder %s25, 2
    %p195 = por %p193, %p194
    %p197 = scmp.ne.s32.totalorder %s182, %s196
    %p198 = scmp.eq.s32.totalorder %s25, 0
    %p199 = por %p197, %p198
    %s201 = sadd.s32 %s200, 1
    %p204 = scmp.eq.s32.totalorder %s19, 2
    %p205 = scmp.ne.s32.totalorder %s200, %s202
    %p206 = scmp.eq.s32.totalorder %s19, 0
    %p207 = por %p205, %p206
    %p208 = scmp.ne.s32.totalorder %s200, %s202
    %p209 = scmp.eq.s32.totalorder %s24, 2
    %p210 = por %p208, %p209
    %p211 = scmp.ne.s32.totalorder %s202, %s203
    %p212 = scmp.eq.s32.totalorder %s24, 0
    %p213 = por %p211, %p212
    %p214 = scmp.ne.s32.totalorder %s202, %s203
    %p215 = scmp.eq.s32.totalorder %s25, 2
    %p216 = por %p214, %p215
    %p218 = scmp.ne.s32.totalorder %s203, %s217
    %p219 = scmp.eq.s32.totalorder %s25, 0
    %p220 = por %p218, %p219
    %s222 = sadd.s32 %s221, 1
    %p225 = scmp.eq.s32.totalorder %s19, 2
    %p226 = scmp.ne.s32.totalorder %s221, %s223
    %p227 = scmp.eq.s32.totalorder %s19, 0
    %p228 = por %p226, %p227
    %p229 = scmp.ne.s32.totalorder %s221, %s223
    %p230 = scmp.eq.s32.totalorder %s24, 2
    %p231 = por %p229, %p230
    %p232 = scmp.ne.s32.totalorder %s223, %s224
    %p233 = scmp.eq.s32.totalorder %s24, 0
    %p234 = por %p232, %p233
    %p235 = scmp.ne.s32.totalorder %s223, %s224
    %p236 = scmp.eq.s32.totalorder %s25, 2
    %p237 = por %p235, %p236
    %p239 = scmp.ne.s32.totalorder %s224, %s238
    %p240 = scmp.eq.s32.totalorder %s25, 0
    %p241 = por %p239, %p240
    %s243 = sadd.s32 %s242, 1
    %p246 = scmp.eq.s32.totalorder %s19, 2
    %p247 = scmp.ne.s32.totalorder %s242, %s244
    %p248 = scmp.eq.s32.totalorder %s19, 0
    %p249 = por %p247, %p248
    %p250 = scmp.ne.s32.totalorder %s242, %s244
    %p251 = scmp.eq.s32.totalorder %s24, 2
    %p252 = por %p250, %p251
    %p253 = scmp.ne.s32.totalorder %s244, %s245
    %p254 = scmp.eq.s32.totalorder %s24, 0
    %p255 = por %p253, %p254
    %p256 = scmp.ne.s32.totalorder %s244, %s245
    %p257 = scmp.eq.s32.totalorder %s25, 2
    %p258 = por %p256, %p257
    %p260 = scmp.ne.s32.totalorder %s245, %s259
    %p261 = scmp.eq.s32.totalorder %s25, 0
    %p262 = por %p260, %p261
    %s264 = sadd.s32 %s263, 1
    %p267 = scmp.eq.s32.totalorder %s19, 2
    %p268 = scmp.ne.s32.totalorder %s263, %s265
    %p269 = scmp.eq.s32.totalorder %s19, 0
    %p270 = por %p268, %p269
    %p271 = scmp.ne.s32.totalorder %s263, %s265
    %p272 = scmp.eq.s32.totalorder %s24, 2
    %p273 = por %p271, %p272
    %p274 = scmp.ne.s32.totalorder %s265, %s266
    %p275 = scmp.eq.s32.totalorder %s24, 0
    %p276 = por %p274, %p275
    %p277 = scmp.ne.s32.totalorder %s265, %s266
    %p278 = scmp.eq.s32.totalorder %s25, 2
    %p279 = por %p277, %p278
    %p281 = scmp.ne.s32.totalorder %s266, %s280
    %p282 = scmp.eq.s32.totalorder %s25, 0
    %p283 = por %p281, %p282
    %s285 = sadd.s32 %s284, 1
    %p288 = scmp.eq.s32.totalorder %s19, 2
    %p289 = scmp.ne.s32.totalorder %s284, %s286
    %p290 = scmp.eq.s32.totalorder %s19, 0
    %p291 = por %p289, %p290
    %p292 = scmp.ne.s32.totalorder %s284, %s286
    %p293 = scmp.eq.s32.totalorder %s24, 2
    %p294 = por %p292, %p293
    %p295 = scmp.ne.s32.totalorder %s286, %s287
    %p296 = scmp.eq.s32.totalorder %s24, 0
    %p297 = por %p295, %p296
    %p298 = scmp.ne.s32.totalorder %s286, %s287
    %p299 = scmp.eq.s32.totalorder %s25, 2
    %p300 = por %p298, %p299
    %p302 = scmp.ne.s32.totalorder %s287, %s301
    %p303 = scmp.eq.s32.totalorder %s25, 0
    %p304 = por %p302, %p303
    %s305 = ssub.s32 %s19, %s26
    %p306 = scmp.eq.s32.totalorder %s305, 0
    %s308 = sadd.s32 %s307, 1
    %s309 = scalar_select %p306, %s307, %s308
    %p312 = pneg %p306
    %p313 = scmp.eq.s32.totalorder %s19, 2
    %p314 = por %p312, %p313
    %p315 = scmp.ne.s32.totalorder %s307, %s310
    %p316 = scmp.eq.s32.totalorder %s19, 0
    %p317 = por %p315, %p316
    %p318 = scmp.ne.s32.totalorder %s307, %s310
    %p319 = scmp.eq.s32.totalorder %s24, 2
    %p320 = por %p318, %p319
    %p321 = scmp.ne.s32.totalorder %s310, %s311
    %p322 = scmp.eq.s32.totalorder %s24, 0
    %p323 = por %p321, %p322
    %p324 = scmp.ne.s32.totalorder %s310, %s311
    %p325 = scmp.eq.s32.totalorder %s25, 2
    %p326 = por %p324, %p325
    %p328 = scmp.ne.s32.totalorder %s311, %s327
    %p329 = scmp.eq.s32.totalorder %s25, 0
    %p330 = por %p328, %p329
    %p331 = scmp.le.s32.totalorder 1, %s19
    %p332 = scmp.lt.s32.totalorder %s19, 4
    %p333 = pnand %p331, %p332
    %p334 = pneg %p333
    // Predicated region
    $region9: #{tpu_custom_call.1} parent=5 // pred_check
      _
    $region10: #{tpu_custom_call.1} parent=5 // pred_check_branch
      %336 = sbr.rel (%p333) target = $region12
    $region11: #{tpu_custom_call.1} parent=5 // pred_region
      %s337 = ssub.s32 %s19, 1
      // Predicated region
      $region13: #{tpu_custom_call.1} parent=11 // pred_check
        %p338 = pneg %p66
      $region14: #{tpu_custom_call.1} parent=11 // pred_check_branch
        %340 = sbr.rel (%p338) target = $region16
      $region15: #{tpu_custom_call.1} parent=11 // pred_region
        _
      $region16: #{tpu_custom_call.1} parent=11 // pred_fallthru
        _
      // Predicated region
      $region17: #{tpu_custom_call.1} parent=11 // pred_check
        %p341 = pneg %p87
      $region18: #{tpu_custom_call.1} parent=11 // pred_check_branch
        %343 = sbr.rel (%p341) target = $region20
      $region19: #{tpu_custom_call.1} parent=11 // pred_region
        _
      $region20: #{tpu_custom_call.1} parent=11 // pred_fallthru
        _
      // Predicated region
      $region21: #{tpu_custom_call.1} parent=11 // pred_check
        %p344 = pneg %p108
      $region22: #{tpu_custom_call.1} parent=11 // pred_check_branch
        %346 = sbr.rel (%p344) target = $region24
      $region23: #{tpu_custom_call.1} parent=11 // pred_region
        _
      $region24: #{tpu_custom_call.1} parent=11 // pred_fallthru
        _
      // Predicated region
      $region25: #{tpu_custom_call.1} parent=11 // pred_check
        %p347 = pneg %p129
      $region26: #{tpu_custom_call.1} parent=11 // pred_check_branch
        %349 = sbr.rel (%p347) target = $region28
      $region27: #{tpu_custom_call.1} parent=11 // pred_region
        _
      $region28: #{tpu_custom_call.1} parent=11 // pred_fallthru
        _
      // Predicated region
      $region29: #{tpu_custom_call.1} parent=11 // pred_check
        %p350 = pneg %p150
      $region30: #{tpu_custom_call.1} parent=11 // pred_check_branch
        %352 = sbr.rel (%p350) target = $region32
      $region31: #{tpu_custom_call.1} parent=11 // pred_region
        _
      $region32: #{tpu_custom_call.1} parent=11 // pred_fallthru
        _
      // Predicated region
      $region33: #{tpu_custom_call.1} parent=11 // pred_check
        %p353 = pneg %p171
      $region34: #{tpu_custom_call.1} parent=11 // pred_check_branch
        %355 = sbr.rel (%p353) target = $region36
      $region35: #{tpu_custom_call.1} parent=11 // pred_region
        _
      $region36: #{tpu_custom_call.1} parent=11 // pred_fallthru
        _
      // Predicated region
      $region37: #{tpu_custom_call.1} parent=11 // pred_check
        %p356 = pneg %p192
      $region38: #{tpu_custom_call.1} parent=11 // pred_check_branch
        %358 = sbr.rel (%p356) target = $region40
      $region39: #{tpu_custom_call.1} parent=11 // pred_region
        _
      $region40: #{tpu_custom_call.1} parent=11 // pred_fallthru
        _
      // Predicated region
      $region41: #{tpu_custom_call.1} parent=11 // pred_check
        %p359 = pneg %p213
      $region42: #{tpu_custom_call.1} parent=11 // pred_check_branch
        %361 = sbr.rel (%p359) target = $region44
      $region43: #{tpu_custom_call.1} parent=11 // pred_region
        _
      $region44: #{tpu_custom_call.1} parent=11 // pred_fallthru
        _
      // Predicated region
      $region45: #{tpu_custom_call.1} parent=11 // pred_check
        %p362 = pneg %p234
      $region46: #{tpu_custom_call.1} parent=11 // pred_check_branch
        %364 = sbr.rel (%p362) target = $region48
      $region47: #{tpu_custom_call.1} parent=11 // pred_region
        _
      $region48: #{tpu_custom_call.1} parent=11 // pred_fallthru
        _
      // Predicated region
      $region49: #{tpu_custom_call.1} parent=11 // pred_check
        %p365 = pneg %p255
      $region50: #{tpu_custom_call.1} parent=11 // pred_check_branch
        %367 = sbr.rel (%p365) target = $region52
      $region51: #{tpu_custom_call.1} parent=11 // pred_region
        _
      $region52: #{tpu_custom_call.1} parent=11 // pred_fallthru
        _
      // Predicated region
      $region53: #{tpu_custom_call.1} parent=11 // pred_check
        %p368 = pneg %p276
      $region54: #{tpu_custom_call.1} parent=11 // pred_check_branch
        %370 = sbr.rel (%p368) target = $region56
      $region55: #{tpu_custom_call.1} parent=11 // pred_region
        _
      $region56: #{tpu_custom_call.1} parent=11 // pred_fallthru
        _
      // Predicated region
      $region57: #{tpu_custom_call.1} parent=11 // pred_check
        %p371 = pneg %p297
      $region58: #{tpu_custom_call.1} parent=11 // pred_check_branch
        %373 = sbr.rel (%p371) target = $region60
      $region59: #{tpu_custom_call.1} parent=11 // pred_region
        _
      $region60: #{tpu_custom_call.1} parent=11 // pred_fallthru
        _
    $region12: #{tpu_custom_call.1} parent=5 // pred_fallthru
      _
    %p374 = scmp.lt.s32.totalorder %s19, 3
    // Predicated region
    $region61: #{tpu_custom_call.1} parent=5 // pred_check
      %p375 = pneg %p374
    $region62: #{tpu_custom_call.1} parent=5 // pred_check_branch
      %377 = sbr.rel (%p375) target = $region64
    $region63: #{tpu_custom_call.1} parent=5 // pred_region
      // Predicated region
      $region65: #{tpu_custom_call.1} parent=63 // pred_check
        %p378 = pneg %p39
      $region66: #{tpu_custom_call.1} parent=63 // pred_check_branch
        %380 = sbr.rel (%p378) target = $region68
      $region67: #{tpu_custom_call.1} parent=63 // pred_region
        %s381 = smul.u32 2, %s19
        %p382 = scmp.lt.s32.totalorder %s381, 5
        %s383 = scalar_select %p382, %s381, 5
        %s384 = smul.addr %s383, 8
        %s385 = scalar_lea.vmem %s0, %s384
        %s386 = smul.u32 2, %s19
      $region68: #{tpu_custom_call.1} parent=63 // pred_fallthru
        _
    $region64: #{tpu_custom_call.1} parent=5 // pred_fallthru
      _
    %p387 = scmp.le.s32.totalorder 1, %s19
    %p388 = scmp.lt.s32.totalorder %s19, 4
    %p389 = pnand %p387, %p388
    %p390 = pneg %p389
    // Predicated region
    $region69: #{tpu_custom_call.1} parent=5 // pred_check
      _
    $region70: #{tpu_custom_call.1} parent=5 // pred_check_branch
      %392 = sbr.rel (%p389) target = $region72
    $region71: #{tpu_custom_call.1} parent=5 // pred_region
      %s393 = ssub.s32 %s19, 1
      %s394 = smul.u32 2, %s24
      %p395 = scmp.lt.s32.totalorder %s394, 5
      %s396 = scalar_select %p395, %s394, 5
      %s397 = smul.addr %s396, 8
      %s398 = scalar_lea.vmem %s0, %s397
      %p399 = pneg %p45
      %p400 = pneg %p42
      %p401 = pneg %p66
      %p402 = pneg %p63
      %p403 = pneg %p87
      %p404 = pneg %p84
      %p405 = pneg %p108
      %p406 = pneg %p105
      %p407 = pneg %p129
      %p408 = pneg %p126
      %p409 = pneg %p150
      %p410 = pneg %p147
      %p411 = pneg %p171
      %p412 = pneg %p168
      %p413 = pneg %p192
      %p414 = pneg %p189
      %p415 = pneg %p213
      %p416 = pneg %p210
      %p417 = pneg %p234
      %p418 = pneg %p231
      %p419 = pneg %p255
      %p420 = pneg %p252
      %p421 = pneg %p276
      %p422 = pneg %p273
      %p423 = pneg %p297
      %p424 = pneg %p294
      %p425 = pneg %p323
      %p426 = pneg %p320
      %s427 = smul.u32 2, %s24
      %p428 = scmp.lt.s32.totalorder %s427, 5
      %s429 = scalar_select %p428, %s427, 5
      %s430 = smul.addr %s429, 8
      %s431 = scalar_lea.vmem %s13, %s430
      %s432 = smul.u32 2, %s24
      %p433 = scmp.lt.s32.totalorder %s432, 5
      %s434 = scalar_select %p433, %s432, 5
      %s435 = smul.addr %s434, 8
      %s436 = scalar_lea.vmem %s0, %s435
      %s437 = smul.u32 2, %s24
      %s438 = smul.u32 2, %s24
      %p439 = scmp.lt.s32.totalorder %s438, 5
      %s440 = scalar_select %p439, %s438, 5
      %s441 = smul.addr %s440, 8
      %s442 = scalar_lea.vmem %s13, %s441
      %s443 = smul.u32 2, %s24
      %v445 = vld [vmem:[%s436] sm:$0xff]
      %v446 = vld [vmem:[%s436 + $0x8] sm:$0xff]
      %v447 = vpack.c.bf16 %v446, %v445
      %v448 = vld [vmem:[%s1] sm:$0xff]
      %v449 = vld [vmem:[%s1 + $0x8] sm:$0xff]
      %v450 = vld [vmem:[%s1 + $0x10] sm:$0xff]
      %v451 = vld [vmem:[%s1 + $0x18] sm:$0xff]
      %v452 = vld [vmem:[%s1 + $0x20] sm:$0xff]
      %v453 = vld [vmem:[%s1 + $0x28] sm:$0xff]
      %v454 = vld [vmem:[%s1 + $0x30] sm:$0xff]
      %v455 = vld [vmem:[%s1 + $0x38] sm:$0xff]
      %v464 = vunpack.c.l.b16 %v448
      %v465 = vunpack.c.h.b16 %v448
      %v466 = vunpack.c.l.b16 %v449
      %v467 = vunpack.c.h.b16 %v449
      %v468 = vunpack.c.l.b16 %v450
      %v469 = vunpack.c.h.b16 %v450
      %v470 = vunpack.c.l.b16 %v451
      %v471 = vunpack.c.h.b16 %v451
      %v472 = vunpack.c.l.b16 %v452
      %v473 = vunpack.c.h.b16 %v452
      %v474 = vunpack.c.l.b16 %v453
      %v475 = vunpack.c.h.b16 %v453
      %v476 = vunpack.c.l.b16 %v454
      %v477 = vunpack.c.h.b16 %v454
      %v478 = vunpack.c.l.b16 %v455
      %v479 = vunpack.c.h.b16 %v455
      %v480 = vpack.c.b16 %v466, %v464
      %v481 = vpack.c.b16 %v467, %v465
      %v482 = vpack.c.b16 %v470, %v468
      %v483 = vpack.c.b16 %v471, %v469
      %v484 = vpack.c.b16 %v474, %v472
      %v485 = vpack.c.b16 %v475, %v473
      %v486 = vpack.c.b16 %v478, %v476
      %v487 = vpack.c.b16 %v479, %v477
      %vm496 = vcmask 523264
      %v498 = vsel %vm496, %v447, 0
      %500 = vmatpush.bf16.msra.mxu0 0
      %501 = vmatpush.bf16.msra.mxu0 0
      %502 = vmatpush.bf16.msra.mxu0 0
      %503 = vmatpush.bf16.msra.mxu0 0
      %504 = vmatpush.bf16.msra.mxu0 %v486
      %505 = vmatpush.bf16.msra.mxu0 %v484
      %506 = vmatpush.bf16.msra.mxu0 %v482
      %507 = vmatpush.bf16.msra.mxu0 %v480
      %508 = vmatmul.bf16.gmra.mxu0 %v498
      %v509 = vpop.f32.mrf.mxu0
      %v510 = vadd.f32 0.0, %v509
      %v511 = vpop.f32.mrf.mxu0
      %v512 = vadd.f32 0.0, %v511
      %513 = vdwg.mxu0
      %514 = vmatpush.bf16.msra.mxu0 0
      %515 = vmatpush.bf16.msra.mxu0 0
      %516 = vmatpush.bf16.msra.mxu0 0
      %517 = vmatpush.bf16.msra.mxu0 0
      %518 = vmatpush.bf16.msra.mxu0 %v487
      %519 = vmatpush.bf16.msra.mxu0 %v485
      %520 = vmatpush.bf16.msra.mxu0 %v483
      %521 = vmatpush.bf16.msra.mxu0 %v481
      %522 = vmatmul.bf16.gmra.mxu0 %v498
      %v523 = vpop.f32.mrf.mxu0
      %v524 = vadd.f32 0.0, %v523
      %v525 = vpop.f32.mrf.mxu0
      %v526 = vadd.f32 0.0, %v525
      %527 = vdwg.mxu0
      %v528 = vld [vmem:[%s2] sm:$0x1]
      %v530 = vperm.slane %v528, 0
      %v532 = vadd.f32 %v524, %v530
      %v533 = vadd.f32 %v526, %v530
      %536 = vrot.lane.b32.xlu0 %v445, 64
      %v537 = vpop.permute.xlu0 %536
      %538 = vrot.lane.b32.xlu0 %v446, 64
      %v539 = vpop.permute.xlu0 %538
      %v542 = vadd.f32 %v532, %v537
      %v543 = vadd.f32 %v533, %v539
      %v544 = vld [vmem:[%s3] sm:$0x1]
      %545 = vset.pattern.permute.xlu0 96
      %546 = vperm.xlu0 %545, %v445
      %v547 = vpop.permute.xlu0 %546
      %549 = vset.pattern.permute.xlu0 96
      %550 = vperm.xlu0 %549, %v446
      %v551 = vpop.permute.xlu0 %550
      %v554 = vperm.slane %v544, 0
      %v556 = vmul.f32 %v547, %v554
      %v557 = vmul.f32 %v551, %v554
      %558 = vset.pattern.permute.xlu0 97
      %559 = vperm.xlu0 %558, %v445
      %v560 = vpop.permute.xlu0 %559
      %562 = vset.pattern.permute.xlu0 97
      %563 = vperm.xlu0 %562, %v446
      %v564 = vpop.permute.xlu0 %563
      %v566 = vmul.f32 %v560, %v554
      %v567 = vmul.f32 %v564, %v554
      %568 = vset.pattern.permute.xlu0 98
      %569 = vperm.xlu0 %568, %v445
      %v570 = vpop.permute.xlu0 %569
      %572 = vset.pattern.permute.xlu0 98
      %573 = vperm.xlu0 %572, %v446
      %v574 = vpop.permute.xlu0 %573
      %v576 = vmul.f32 %v570, %v554
      %v577 = vmul.f32 %v574, %v554
      %578 = vset.pattern.permute.xlu0 99
      %579 = vperm.xlu0 %578, %v445
      %v580 = vpop.permute.xlu0 %579
      %582 = vset.pattern.permute.xlu0 99
      %583 = vperm.xlu0 %582, %v446
      %v584 = vpop.permute.xlu0 %583
      %v586 = vmul.f32 %v580, %v554
      %v587 = vmul.f32 %v584, %v554
      %v588 = vadd.f32 %v556, 1.5707964
      %v589 = vadd.f32 %v557, 1.5707964
      %v590 = vadd.f32 %v566, 1.5707964
      %v591 = vadd.f32 %v567, 1.5707964
      %v592 = vadd.f32 %v576, 1.5707964
      %v593 = vadd.f32 %v577, 1.5707964
      %v594 = vadd.f32 %v586, 1.5707964
      %v595 = vadd.f32 %v587, 1.5707964
      %598 = vrot.lane.b32.xlu0 %v588, 32
      %v599 = vpop.permute.xlu0 %598
      %600 = vrot.lane.b32.xlu0 %v589, 32
      %v601 = vpop.permute.xlu0 %600
      %606 = vrot.lane.b32.xlu0 %v566, 64
      %v607 = vpop.permute.xlu0 %606
      %608 = vrot.lane.b32.xlu0 %v567, 64
      %v609 = vpop.permute.xlu0 %608
      %614 = vrot.lane.b32.xlu0 %v590, 96
      %v615 = vpop.permute.xlu0 %614
      %616 = vrot.lane.b32.xlu0 %v591, 96
      %v617 = vpop.permute.xlu0 %616
      %622 = vrot.lane.b32.xlu0 %v592, 32
      %v623 = vpop.permute.xlu0 %622
      %624 = vrot.lane.b32.xlu0 %v593, 32
      %v625 = vpop.permute.xlu0 %624
      %630 = vrot.lane.b32.xlu0 %v586, 64
      %v631 = vpop.permute.xlu0 %630
      %632 = vrot.lane.b32.xlu0 %v587, 64
      %v633 = vpop.permute.xlu0 %632
      %638 = vrot.lane.b32.xlu0 %v594, 96
      %v639 = vpop.permute.xlu0 %638
      %640 = vrot.lane.b32.xlu0 %v595, 96
      %v641 = vpop.permute.xlu0 %640
      %vm644 = vcmask 261120
      %v645 = vsel %vm644, %v556, %v599
      %v646 = vsel %vm644, %v557, %v601
      %v647 = vsel %vm496, %v645, %v607
      %v648 = vsel %vm496, %v646, %v609
      %vm649 = vcmask 785408
      %v650 = vsel %vm649, %v647, %v615
      %v651 = vsel %vm649, %v648, %v617
      %v652 = vsel %vm644, %v576, %v623
      %v653 = vsel %vm644, %v577, %v625
      %v654 = vsel %vm496, %v652, %v631
      %v655 = vsel %vm496, %v653, %v633
      %v656 = vsel %vm649, %v654, %v639
      %v657 = vsel %vm649, %v655, %v641
      %v658 = vand.u32 2147483647, %v650
      %vm659 = vcmp.le.f32.partialorder %v658, 0.7853982
      %vm660 = vcmp.lt.s32.totalorder %v650, 0
      %v661 = vand.u32 %v650, 2139095040
      %v662 = vshrl.u32 %v661, 23
      %v663 = vsub.s32 %v662, 127
      %v664 = vand.u32 2147483647, %v650
      %v665 = vand.u32 %v664, 8388607
      %v666 = vor.u32 %v665, 8388608
      %v667 = vsub.s32 0, %v666
      %v668 = vadd.s32 %v663, 1
      %vm669 = vcmp.gt.s32.totalorder %v668, 0
      %v670 = vsel %vm669, %v668, 0
      %v671 = vshrl.u32 %v670, 5
      %v672 = vand.u32 %v670, 31
      %v673 = vsub.s32 32, %v672
      %v674 = vshrl.u32 683565275, %v673
      %v675 = vshll.u32 683565275, %v672
      %v676 = vshrl.u32 2475754826, %v673
      %v677 = vor.u32 %v675, %v676
      %v678 = vshll.u32 2475754826, %v672
      %v679 = vshrl.u32 2131351028, %v673
      %v680 = vor.u32 %v678, %v679
      %v681 = vshll.u32 2131351028, %v672
      %v682 = vshrl.u32 2102212464, %v673
      %v683 = vor.u32 %v681, %v682
      %v684 = vshll.u32 2102212464, %v672
      %v685 = vshrl.u32 920167782, %v673
      %v686 = vor.u32 %v684, %v685
      %v687 = vshll.u32 920167782, %v672
      %v688 = vshrl.u32 1326507024, %v673
      %v689 = vor.u32 %v687, %v688
      %vm690 = vcmp.lt.s32.totalorder %v671, 1
      %vm691 = vcmp.lt.s32.totalorder %v671, 2
      %vm692 = vcmp.lt.s32.totalorder %v671, 3
      %vm693 = vcmp.lt.s32.totalorder %v671, 4
      %v694 = vsel %vm690, %v674, %v677
      %v695 = vsel %vm693, %v683, 2102212464
      %v696 = vsel %vm692, %v680, %v695
      %v697 = vsel %vm691, %v694, %v696
      %v698 = vsel %vm690, %v677, %v680
      %v699 = vsel %vm693, %v686, 920167782
      %v700 = vsel %vm692, %v683, %v699
      %v701 = vsel %vm691, %v698, %v700
      %v702 = vsel %vm690, %v680, %v683
      %v703 = vsel %vm693, %v689, 1326507024
      %v704 = vsel %vm692, %v686, %v703
      %v705 = vsel %vm691, %v702, %v704
      %v706 = vshll.u32 %v666, 8
      %v707 = vand.u32 %v706, 65535
      %v708 = vshrl.u32 %v706, 16
      %v709 = vand.u32 %v705, 65535
      %v710 = vshrl.u32 %v705, 16
      %v711 = vmul.u32 %v707, %v709
      %v712 = vmul.u32 %v707, %v710
      %v713 = vmul.u32 %v708, %v709
      %v714 = vmul.u32 %v708, %v710
      %v715 = vshll.u32 %v712, 16
      %v716 = vshrl.u32 %v712, 16
      %v717 = vshll.u32 %v713, 16
      %v718 = vshrl.u32 %v713, 16
      %vm719 = vc.u32 %v711, %v715
      %v720 = vsel %vm719, 1, 0
      %v721 = vadd.s32 %v711, %v715
      %v722 = vadd.s32 %v714, %v720
      %vm723 = vc.u32 %v721, %v717
      %v724 = vsel %vm723, 1, 0
      %v725 = vadd.s32 %v721, %v717
      %v726 = vadd.s32 %v722, %v724
      %v727 = vadd.s32 %v726, %v716
      %v728 = vadd.s32 %v727, %v718
      %v729 = vand.u32 %v706, 65535
      %v730 = vshrl.u32 %v706, 16
      %v731 = vand.u32 %v701, 65535
      %v732 = vshrl.u32 %v701, 16
      %v733 = vmul.u32 %v729, %v731
      %v734 = vmul.u32 %v729, %v732
      %v735 = vmul.u32 %v730, %v731
      %v736 = vmul.u32 %v730, %v732
      %v737 = vshll.u32 %v734, 16
      %v738 = vshrl.u32 %v734, 16
      %v739 = vshll.u32 %v735, 16
      %v740 = vshrl.u32 %v735, 16
      %vm741 = vc.u32 %v733, %v737
      %v742 = vsel %vm741, 1, 0
      %v743 = vadd.s32 %v733, %v737
      %v744 = vadd.s32 %v736, %v742
      %vm745 = vc.u32 %v743, %v739
      %v746 = vsel %vm745, 1, 0
      %v747 = vadd.s32 %v743, %v739
      %v748 = vadd.s32 %v744, %v746
      %v749 = vadd.s32 %v748, %v738
      %v750 = vadd.s32 %v749, %v740
      %v751 = vmul.u32 %v706, %v697
      %v752 = vadd.s32 %v728, %v747
      %vm753 = vc.u32 %v728, %v747
      %v754 = vadd.s32 %v750, 1
      %v755 = vsel %vm753, %v754, %v750
      %v756 = vadd.s32 %v751, %v755
      %v757 = vadd.s32 %v756, 536870912
      %v758 = vshrl.u32 %v757, 30
      %v759 = vshll.u32 %v758, 30
      %v760 = vsub.s32 %v756, %v759
      %vm761 = vcmp.lt.s32.totalorder %v760, 0
      %v762 = vsub.s32 0, %v760
      %v763 = vsel %vm761, %v762, %v760
      %v764 = vclz %v763
      %v765 = vsub.s32 %v764, 2
      %vm766 = vcmp.gt.s32.totalorder 0, %v765
      %v767 = vsel %vm766, 0, %v765
      %v768 = vsub.s32 32, %v767
      %v769 = vshll.u32 %v760, %v767
      %v770 = vshrl.u32 %v752, %v768
      %v771 = vor.u32 %v769, %v770
      %v772 = vsub.s32 4294967266, %v767
      %v773 = vadd.s32 %v772, 127
      %v774 = vshll.u32 %v773, 23
      %v775 = vor.u32 4788187, %v774
      %v776 = vand.u32 2147483647, %v775
      %v778 = vcvt.s32.f32 %v771
      %v779 = vmul.f32 %v778, %v776
      %v780 = vxor.u32 %v779, 2147483648
      %v781 = vsel %vm660, %v780, %v779
      %v782 = vsub.s32 4, %v758
      %v783 = vsel %vm660, %v782, %v758
      %v784 = vsel %vm659, %v650, %v781
      %v785 = vsel %vm659, 0, %v783
      %v786 = vmul.f32 %v784, %v784
      %v787 = vmul.f32 %v786, -0.001358992
      %v788 = vadd.f32 %v787, 0.041655596
      %v789 = vmul.f32 %v786, %v788
      %v790 = vadd.f32 %v789, -0.4999988
      %v791 = vmul.f32 %v786, %v790
      %v792 = vadd.f32 1.0, %v791
      %v793 = vmul.f32 %v784, %v784
      %v794 = vmul.f32 %v793, -0.00019511016
      %v795 = vadd.f32 %v794, 0.008332121
      %v796 = vmul.f32 %v793, %v795
      %v797 = vadd.f32 %v796, -0.16666654
      %v798 = vmul.f32 %v793, %v797
      %v799 = vadd.f32 %v798, 1.0
      %v800 = vmul.f32 %v799, %v784
      %vm801 = vweird.f32 %v650
      %v802 = vadd.s32 %v785, 3
      %v803 = vand.u32 %v802, 3
      %vm804 = vcmp.lt.s32.totalorder %v803, 2
      %vm805 = vcmp.eq.s32.totalorder %v803, 0
      %v806 = vxor.u32 %v800, 2147483648
      %v807 = vsel %vm805, %v792, %v806
      %vm808 = vcmp.eq.s32.totalorder %v803, 2
      %v809 = vxor.u32 %v792, 2147483648
      %v810 = vsel %vm808, %v809, %v800
      %v811 = vsel %vm804, %v807, %v810
      %v812 = vsel %vm801, nan, %v811
      %v813 = vand.u32 2147483647, %v656
      %vm814 = vcmp.le.f32.partialorder %v813, 0.7853982
      %vm815 = vcmp.lt.s32.totalorder %v656, 0
      %v816 = vand.u32 %v656, 2139095040
      %v817 = vshrl.u32 %v816, 23
      %v818 = vsub.s32 %v817, 127
      %v819 = vand.u32 2147483647, %v656
      %v820 = vand.u32 %v819, 8388607
      %v821 = vor.u32 %v820, 8388608
      %v822 = vsub.s32 0, %v821
      %v823 = vadd.s32 %v818, 1
      %vm824 = vcmp.gt.s32.totalorder %v823, 0
      %v825 = vsel %vm824, %v823, 0
      %v826 = vshrl.u32 %v825, 5
      %v827 = vand.u32 %v825, 31
      %v828 = vsub.s32 32, %v827
      %v829 = vshrl.u32 683565275, %v828
      %v830 = vshll.u32 683565275, %v827
      %v831 = vshrl.u32 2475754826, %v828
      %v832 = vor.u32 %v830, %v831
      %v833 = vshll.u32 2475754826, %v827
      %v834 = vshrl.u32 2131351028, %v828
      %v835 = vor.u32 %v833, %v834
      %v836 = vshll.u32 2131351028, %v827
      %v837 = vshrl.u32 2102212464, %v828
      %v838 = vor.u32 %v836, %v837
      %v839 = vshll.u32 2102212464, %v827
      %v840 = vshrl.u32 920167782, %v828
      %v841 = vor.u32 %v839, %v840
      %v842 = vshll.u32 920167782, %v827
      %v843 = vshrl.u32 1326507024, %v828
      %v844 = vor.u32 %v842, %v843
      %vm845 = vcmp.lt.s32.totalorder %v826, 1
      %vm846 = vcmp.lt.s32.totalorder %v826, 2
      %vm847 = vcmp.lt.s32.totalorder %v826, 3
      %vm848 = vcmp.lt.s32.totalorder %v826, 4
      %v849 = vsel %vm845, %v829, %v832
      %v850 = vsel %vm848, %v838, 2102212464
      %v851 = vsel %vm847, %v835, %v850
      %v852 = vsel %vm846, %v849, %v851
      %v853 = vsel %vm845, %v832, %v835
      %v854 = vsel %vm848, %v841, 920167782
      %v855 = vsel %vm847, %v838, %v854
      %v856 = vsel %vm846, %v853, %v855
      %v857 = vsel %vm845, %v835, %v838
      %v858 = vsel %vm848, %v844, 1326507024
      %v859 = vsel %vm847, %v841, %v858
      %v860 = vsel %vm846, %v857, %v859
      %v861 = vshll.u32 %v821, 8
      %v862 = vand.u32 %v861, 65535
      %v863 = vshrl.u32 %v861, 16
      %v864 = vand.u32 %v860, 65535
      %v865 = vshrl.u32 %v860, 16
      %v866 = vmul.u32 %v862, %v864
      %v867 = vmul.u32 %v862, %v865
      %v868 = vmul.u32 %v863, %v864
      %v869 = vmul.u32 %v863, %v865
      %v870 = vshll.u32 %v867, 16
      %v871 = vshrl.u32 %v867, 16
      %v872 = vshll.u32 %v868, 16
      %v873 = vshrl.u32 %v868, 16
      %vm874 = vc.u32 %v866, %v870
      %v875 = vsel %vm874, 1, 0
      %v876 = vadd.s32 %v866, %v870
      %v877 = vadd.s32 %v869, %v875
      %vm878 = vc.u32 %v876, %v872
      %v879 = vsel %vm878, 1, 0
      %v880 = vadd.s32 %v876, %v872
      %v881 = vadd.s32 %v877, %v879
      %v882 = vadd.s32 %v881, %v871
      %v883 = vadd.s32 %v882, %v873
      %v884 = vand.u32 %v861, 65535
      %v885 = vshrl.u32 %v861, 16
      %v886 = vand.u32 %v856, 65535
      %v887 = vshrl.u32 %v856, 16
      %v888 = vmul.u32 %v884, %v886
      %v889 = vmul.u32 %v884, %v887
      %v890 = vmul.u32 %v885, %v886
      %v891 = vmul.u32 %v885, %v887
      %v892 = vshll.u32 %v889, 16
      %v893 = vshrl.u32 %v889, 16
      %v894 = vshll.u32 %v890, 16
      %v895 = vshrl.u32 %v890, 16
      %vm896 = vc.u32 %v888, %v892
      %v897 = vsel %vm896, 1, 0
      %v898 = vadd.s32 %v888, %v892
      %v899 = vadd.s32 %v891, %v897
      %vm900 = vc.u32 %v898, %v894
      %v901 = vsel %vm900, 1, 0
      %v902 = vadd.s32 %v898, %v894
      %v903 = vadd.s32 %v899, %v901
      %v904 = vadd.s32 %v903, %v893
      %v905 = vadd.s32 %v904, %v895
      %v906 = vmul.u32 %v861, %v852
      %v907 = vadd.s32 %v883, %v902
      %vm908 = vc.u32 %v883, %v902
      %v909 = vadd.s32 %v905, 1
      %v910 = vsel %vm908, %v909, %v905
      %v911 = vadd.s32 %v906, %v910
      %v912 = vadd.s32 %v911, 536870912
      %v913 = vshrl.u32 %v912, 30
      %v914 = vshll.u32 %v913, 30
      %v915 = vsub.s32 %v911, %v914
      %vm916 = vcmp.lt.s32.totalorder %v915, 0
      %v917 = vsub.s32 0, %v915
      %v918 = vsel %vm916, %v917, %v915
      %v919 = vclz %v918
      %v920 = vsub.s32 %v919, 2
      %vm921 = vcmp.gt.s32.totalorder 0, %v920
      %v922 = vsel %vm921, 0, %v920
      %v923 = vsub.s32 32, %v922
      %v924 = vshll.u32 %v915, %v922
      %v925 = vshrl.u32 %v907, %v923
      %v926 = vor.u32 %v924, %v925
      %v927 = vsub.s32 4294967266, %v922
      %v928 = vadd.s32 %v927, 127
      %v929 = vshll.u32 %v928, 23
      %v930 = vor.u32 4788187, %v929
      %v931 = vand.u32 2147483647, %v930
      %v933 = vcvt.s32.f32 %v926
      %v934 = vmul.f32 %v933, %v931
      %v935 = vxor.u32 %v934, 2147483648
      %v936 = vsel %vm815, %v935, %v934
      %v937 = vsub.s32 4, %v913
      %v938 = vsel %vm815, %v937, %v913
      %v939 = vsel %vm814, %v656, %v936
      %v940 = vsel %vm814, 0, %v938
      %v941 = vmul.f32 %v939, %v939
      %v942 = vmul.f32 %v941, -0.001358992
      %v943 = vadd.f32 %v942, 0.041655596
      %v944 = vmul.f32 %v941, %v943
      %v945 = vadd.f32 %v944, -0.4999988
      %v946 = vmul.f32 %v941, %v945
      %v947 = vadd.f32 1.0, %v946
      %v948 = vmul.f32 %v939, %v939
      %v949 = vmul.f32 %v948, -0.00019511016
      %v950 = vadd.f32 %v949, 0.008332121
      %v951 = vmul.f32 %v948, %v950
      %v952 = vadd.f32 %v951, -0.16666654
      %v953 = vmul.f32 %v948, %v952
      %v954 = vadd.f32 %v953, 1.0
      %v955 = vmul.f32 %v954, %v939
      %vm956 = vweird.f32 %v656
      %v957 = vadd.s32 %v940, 3
      %v958 = vand.u32 %v957, 3
      %vm959 = vcmp.lt.s32.totalorder %v958, 2
      %vm960 = vcmp.eq.s32.totalorder %v958, 0
      %v961 = vxor.u32 %v955, 2147483648
      %v962 = vsel %vm960, %v947, %v961
      %vm963 = vcmp.eq.s32.totalorder %v958, 2
      %v964 = vxor.u32 %v947, 2147483648
      %v965 = vsel %vm963, %v964, %v955
      %v966 = vsel %vm959, %v962, %v965
      %v967 = vsel %vm956, nan, %v966
      %v968 = vand.u32 2147483647, %v651
      %vm969 = vcmp.le.f32.partialorder %v968, 0.7853982
      %vm970 = vcmp.lt.s32.totalorder %v651, 0
      %v971 = vand.u32 %v651, 2139095040
      %v972 = vshrl.u32 %v971, 23
      %v973 = vsub.s32 %v972, 127
      %v974 = vand.u32 2147483647, %v651
      %v975 = vand.u32 %v974, 8388607
      %v976 = vor.u32 %v975, 8388608
      %v977 = vsub.s32 0, %v976
      %v978 = vadd.s32 %v973, 1
      %vm979 = vcmp.gt.s32.totalorder %v978, 0
      %v980 = vsel %vm979, %v978, 0
      %v981 = vshrl.u32 %v980, 5
      %v982 = vand.u32 %v980, 31
      %v983 = vsub.s32 32, %v982
      %v984 = vshrl.u32 683565275, %v983
      %v985 = vshll.u32 683565275, %v982
      %v986 = vshrl.u32 2475754826, %v983
      %v987 = vor.u32 %v985, %v986
      %v988 = vshll.u32 2475754826, %v982
      %v989 = vshrl.u32 2131351028, %v983
      %v990 = vor.u32 %v988, %v989
      %v991 = vshll.u32 2131351028, %v982
      %v992 = vshrl.u32 2102212464, %v983
      %v993 = vor.u32 %v991, %v992
      %v994 = vshll.u32 2102212464, %v982
      %v995 = vshrl.u32 920167782, %v983
      %v996 = vor.u32 %v994, %v995
      %v997 = vshll.u32 920167782, %v982
      %v998 = vshrl.u32 1326507024, %v983
      %v999 = vor.u32 %v997, %v998
      %vm1000 = vcmp.lt.s32.totalorder %v981, 1
      %vm1001 = vcmp.lt.s32.totalorder %v981, 2
      %vm1002 = vcmp.lt.s32.totalorder %v981, 3
      %vm1003 = vcmp.lt.s32.totalorder %v981, 4
      %v1004 = vsel %vm1000, %v984, %v987
      %v1005 = vsel %vm1003, %v993, 2102212464
      %v1006 = vsel %vm1002, %v990, %v1005
      %v1007 = vsel %vm1001, %v1004, %v1006
      %v1008 = vsel %vm1000, %v987, %v990
      %v1009 = vsel %vm1003, %v996, 920167782
      %v1010 = vsel %vm1002, %v993, %v1009
      %v1011 = vsel %vm1001, %v1008, %v1010
      %v1012 = vsel %vm1000, %v990, %v993
      %v1013 = vsel %vm1003, %v999, 1326507024
      %v1014 = vsel %vm1002, %v996, %v1013
      %v1015 = vsel %vm1001, %v1012, %v1014
      %v1016 = vshll.u32 %v976, 8
      %v1017 = vand.u32 %v1016, 65535
      %v1018 = vshrl.u32 %v1016, 16
      %v1019 = vand.u32 %v1015, 65535
      %v1020 = vshrl.u32 %v1015, 16
      %v1021 = vmul.u32 %v1017, %v1019
      %v1022 = vmul.u32 %v1017, %v1020
      %v1023 = vmul.u32 %v1018, %v1019
      %v1024 = vmul.u32 %v1018, %v1020
      %v1025 = vshll.u32 %v1022, 16
      %v1026 = vshrl.u32 %v1022, 16
      %v1027 = vshll.u32 %v1023, 16
      %v1028 = vshrl.u32 %v1023, 16
      %vm1029 = vc.u32 %v1021, %v1025
      %v1030 = vsel %vm1029, 1, 0
      %v1031 = vadd.s32 %v1021, %v1025
      %v1032 = vadd.s32 %v1024, %v1030
      %vm1033 = vc.u32 %v1031, %v1027
      %v1034 = vsel %vm1033, 1, 0
      %v1035 = vadd.s32 %v1031, %v1027
      %v1036 = vadd.s32 %v1032, %v1034
      %v1037 = vadd.s32 %v1036, %v1026
      %v1038 = vadd.s32 %v1037, %v1028
      %v1039 = vand.u32 %v1016, 65535
      %v1040 = vshrl.u32 %v1016, 16
      %v1041 = vand.u32 %v1011, 65535
      %v1042 = vshrl.u32 %v1011, 16
      %v1043 = vmul.u32 %v1039, %v1041
      %v1044 = vmul.u32 %v1039, %v1042
      %v1045 = vmul.u32 %v1040, %v1041
      %v1046 = vmul.u32 %v1040, %v1042
      %v1047 = vshll.u32 %v1044, 16
      %v1048 = vshrl.u32 %v1044, 16
      %v1049 = vshll.u32 %v1045, 16
      %v1050 = vshrl.u32 %v1045, 16
      %vm1051 = vc.u32 %v1043, %v1047
      %v1052 = vsel %vm1051, 1, 0
      %v1053 = vadd.s32 %v1043, %v1047
      %v1054 = vadd.s32 %v1046, %v1052
      %vm1055 = vc.u32 %v1053, %v1049
      %v1056 = vsel %vm1055, 1, 0
      %v1057 = vadd.s32 %v1053, %v1049
      %v1058 = vadd.s32 %v1054, %v1056
      %v1059 = vadd.s32 %v1058, %v1048
      %v1060 = vadd.s32 %v1059, %v1050
      %v1061 = vmul.u32 %v1016, %v1007
      %v1062 = vadd.s32 %v1038, %v1057
      %vm1063 = vc.u32 %v1038, %v1057
      %v1064 = vadd.s32 %v1060, 1
      %v1065 = vsel %vm1063, %v1064, %v1060
      %v1066 = vadd.s32 %v1061, %v1065
      %v1067 = vadd.s32 %v1066, 536870912
      %v1068 = vshrl.u32 %v1067, 30
      %v1069 = vshll.u32 %v1068, 30
      %v1070 = vsub.s32 %v1066, %v1069
      %vm1071 = vcmp.lt.s32.totalorder %v1070, 0
      %v1072 = vsub.s32 0, %v1070
      %v1073 = vsel %vm1071, %v1072, %v1070
      %v1074 = vclz %v1073
      %v1075 = vsub.s32 %v1074, 2
      %vm1076 = vcmp.gt.s32.totalorder 0, %v1075
      %v1077 = vsel %vm1076, 0, %v1075
      %v1078 = vsub.s32 32, %v1077
      %v1079 = vshll.u32 %v1070, %v1077
      %v1080 = vshrl.u32 %v1062, %v1078
      %v1081 = vor.u32 %v1079, %v1080
      %v1082 = vsub.s32 4294967266, %v1077
      %v1083 = vadd.s32 %v1082, 127
      %v1084 = vshll.u32 %v1083, 23
      %v1085 = vor.u32 4788187, %v1084
      %v1086 = vand.u32 2147483647, %v1085
      %v1088 = vcvt.s32.f32 %v1081
      %v1089 = vmul.f32 %v1088, %v1086
      %v1090 = vxor.u32 %v1089, 2147483648
      %v1091 = vsel %vm970, %v1090, %v1089
      %v1092 = vsub.s32 4, %v1068
      %v1093 = vsel %vm970, %v1092, %v1068
      %v1094 = vsel %vm969, %v651, %v1091
      %v1095 = vsel %vm969, 0, %v1093
      %v1096 = vmul.f32 %v1094, %v1094
      %v1097 = vmul.f32 %v1096, -0.001358992
      %v1098 = vadd.f32 %v1097, 0.041655596
      %v1099 = vmul.f32 %v1096, %v1098
      %v1100 = vadd.f32 %v1099, -0.4999988
      %v1101 = vmul.f32 %v1096, %v1100
      %v1102 = vadd.f32 1.0, %v1101
      %v1103 = vmul.f32 %v1094, %v1094
      %v1104 = vmul.f32 %v1103, -0.00019511016
      %v1105 = vadd.f32 %v1104, 0.008332121
      %v1106 = vmul.f32 %v1103, %v1105
      %v1107 = vadd.f32 %v1106, -0.16666654
      %v1108 = vmul.f32 %v1103, %v1107
      %v1109 = vadd.f32 %v1108, 1.0
      %v1110 = vmul.f32 %v1109, %v1094
      %vm1111 = vweird.f32 %v651
      %v1112 = vadd.s32 %v1095, 3
      %v1113 = vand.u32 %v1112, 3
      %vm1114 = vcmp.lt.s32.totalorder %v1113, 2
      %vm1115 = vcmp.eq.s32.totalorder %v1113, 0
      %v1116 = vxor.u32 %v1110, 2147483648
      %v1117 = vsel %vm1115, %v1102, %v1116
      %vm1118 = vcmp.eq.s32.totalorder %v1113, 2
      %v1119 = vxor.u32 %v1102, 2147483648
      %v1120 = vsel %vm1118, %v1119, %v1110
      %v1121 = vsel %vm1114, %v1117, %v1120
      %v1122 = vsel %vm1111, nan, %v1121
      %v1123 = vand.u32 2147483647, %v657
      %vm1124 = vcmp.le.f32.partialorder %v1123, 0.7853982
      %vm1125 = vcmp.lt.s32.totalorder %v657, 0
      %v1126 = vand.u32 %v657, 2139095040
      %v1127 = vshrl.u32 %v1126, 23
      %v1128 = vsub.s32 %v1127, 127
      %v1129 = vand.u32 2147483647, %v657
      %v1130 = vand.u32 %v1129, 8388607
      %v1131 = vor.u32 %v1130, 8388608
      %v1132 = vsub.s32 0, %v1131
      %v1133 = vadd.s32 %v1128, 1
      %vm1134 = vcmp.gt.s32.totalorder %v1133, 0
      %v1135 = vsel %vm1134, %v1133, 0
      %v1136 = vshrl.u32 %v1135, 5
      %v1137 = vand.u32 %v1135, 31
      %v1138 = vsub.s32 32, %v1137
      %v1139 = vshrl.u32 683565275, %v1138
      %v1140 = vshll.u32 683565275, %v1137
      %v1141 = vshrl.u32 2475754826, %v1138
      %v1142 = vor.u32 %v1140, %v1141
      %v1143 = vshll.u32 2475754826, %v1137
      %v1144 = vshrl.u32 2131351028, %v1138
      %v1145 = vor.u32 %v1143, %v1144
      %v1146 = vshll.u32 2131351028, %v1137
      %v1147 = vshrl.u32 2102212464, %v1138
      %v1148 = vor.u32 %v1146, %v1147
      %v1149 = vshll.u32 2102212464, %v1137
      %v1150 = vshrl.u32 920167782, %v1138
      %v1151 = vor.u32 %v1149, %v1150
      %v1152 = vshll.u32 920167782, %v1137
      %v1153 = vshrl.u32 1326507024, %v1138
      %v1154 = vor.u32 %v1152, %v1153
      %vm1155 = vcmp.lt.s32.totalorder %v1136, 1
      %vm1156 = vcmp.lt.s32.totalorder %v1136, 2
      %vm1157 = vcmp.lt.s32.totalorder %v1136, 3
      %vm1158 = vcmp.lt.s32.totalorder %v1136, 4
      %v1159 = vsel %vm1155, %v1139, %v1142
      %v1160 = vsel %vm1158, %v1148, 2102212464
      %v1161 = vsel %vm1157, %v1145, %v1160
      %v1162 = vsel %vm1156, %v1159, %v1161
      %v1163 = vsel %vm1155, %v1142, %v1145
      %v1164 = vsel %vm1158, %v1151, 920167782
      %v1165 = vsel %vm1157, %v1148, %v1164
      %v1166 = vsel %vm1156, %v1163, %v1165
      %v1167 = vsel %vm1155, %v1145, %v1148
      %v1168 = vsel %vm1158, %v1154, 1326507024
      %v1169 = vsel %vm1157, %v1151, %v1168
      %v1170 = vsel %vm1156, %v1167, %v1169
      %v1171 = vshll.u32 %v1131, 8
      %v1172 = vand.u32 %v1171, 65535
      %v1173 = vshrl.u32 %v1171, 16
      %v1174 = vand.u32 %v1170, 65535
      %v1175 = vshrl.u32 %v1170, 16
      %v1176 = vmul.u32 %v1172, %v1174
      %v1177 = vmul.u32 %v1172, %v1175
      %v1178 = vmul.u32 %v1173, %v1174
      %v1179 = vmul.u32 %v1173, %v1175
      %v1180 = vshll.u32 %v1177, 16
      %v1181 = vshrl.u32 %v1177, 16
      %v1182 = vshll.u32 %v1178, 16
      %v1183 = vshrl.u32 %v1178, 16
      %vm1184 = vc.u32 %v1176, %v1180
      %v1185 = vsel %vm1184, 1, 0
      %v1186 = vadd.s32 %v1176, %v1180
      %v1187 = vadd.s32 %v1179, %v1185
      %vm1188 = vc.u32 %v1186, %v1182
      %v1189 = vsel %vm1188, 1, 0
      %v1190 = vadd.s32 %v1186, %v1182
      %v1191 = vadd.s32 %v1187, %v1189
      %v1192 = vadd.s32 %v1191, %v1181
      %v1193 = vadd.s32 %v1192, %v1183
      %v1194 = vand.u32 %v1171, 65535
      %v1195 = vshrl.u32 %v1171, 16
      %v1196 = vand.u32 %v1166, 65535
      %v1197 = vshrl.u32 %v1166, 16
      %v1198 = vmul.u32 %v1194, %v1196
      %v1199 = vmul.u32 %v1194, %v1197
      %v1200 = vmul.u32 %v1195, %v1196
      %v1201 = vmul.u32 %v1195, %v1197
      %v1202 = vshll.u32 %v1199, 16
      %v1203 = vshrl.u32 %v1199, 16
      %v1204 = vshll.u32 %v1200, 16
      %v1205 = vshrl.u32 %v1200, 16
      %vm1206 = vc.u32 %v1198, %v1202
      %v1207 = vsel %vm1206, 1, 0
      %v1208 = vadd.s32 %v1198, %v1202
      %v1209 = vadd.s32 %v1201, %v1207
      %vm1210 = vc.u32 %v1208, %v1204
      %v1211 = vsel %vm1210, 1, 0
      %v1212 = vadd.s32 %v1208, %v1204
      %v1213 = vadd.s32 %v1209, %v1211
      %v1214 = vadd.s32 %v1213, %v1203
      %v1215 = vadd.s32 %v1214, %v1205
      %v1216 = vmul.u32 %v1171, %v1162
      %v1217 = vadd.s32 %v1193, %v1212
      %vm1218 = vc.u32 %v1193, %v1212
      %v1219 = vadd.s32 %v1215, 1
      %v1220 = vsel %vm1218, %v1219, %v1215
      %v1221 = vadd.s32 %v1216, %v1220
      %v1222 = vadd.s32 %v1221, 536870912
      %v1223 = vshrl.u32 %v1222, 30
      %v1224 = vshll.u32 %v1223, 30
      %v1225 = vsub.s32 %v1221, %v1224
      %vm1226 = vcmp.lt.s32.totalorder %v1225, 0
      %v1227 = vsub.s32 0, %v1225
      %v1228 = vsel %vm1226, %v1227, %v1225
      %v1229 = vclz %v1228
      %v1230 = vsub.s32 %v1229, 2
      %vm1231 = vcmp.gt.s32.totalorder 0, %v1230
      %v1232 = vsel %vm1231, 0, %v1230
      %v1233 = vsub.s32 32, %v1232
      %v1234 = vshll.u32 %v1225, %v1232
      %v1235 = vshrl.u32 %v1217, %v1233
      %v1236 = vor.u32 %v1234, %v1235
      %v1237 = vsub.s32 4294967266, %v1232
      %v1238 = vadd.s32 %v1237, 127
      %v1239 = vshll.u32 %v1238, 23
      %v1240 = vor.u32 4788187, %v1239
      %v1241 = vand.u32 2147483647, %v1240
      %v1243 = vcvt.s32.f32 %v1236
      %v1244 = vmul.f32 %v1243, %v1241
      %v1245 = vxor.u32 %v1244, 2147483648
      %v1246 = vsel %vm1125, %v1245, %v1244
      %v1247 = vsub.s32 4, %v1223
      %v1248 = vsel %vm1125, %v1247, %v1223
      %v1249 = vsel %vm1124, %v657, %v1246
      %v1250 = vsel %vm1124, 0, %v1248
      %v1251 = vmul.f32 %v1249, %v1249
      %v1252 = vmul.f32 %v1251, -0.001358992
      %v1253 = vadd.f32 %v1252, 0.041655596
      %v1254 = vmul.f32 %v1251, %v1253
      %v1255 = vadd.f32 %v1254, -0.4999988
      %v1256 = vmul.f32 %v1251, %v1255
      %v1257 = vadd.f32 1.0, %v1256
      %v1258 = vmul.f32 %v1249, %v1249
      %v1259 = vmul.f32 %v1258, -0.00019511016
      %v1260 = vadd.f32 %v1259, 0.008332121
      %v1261 = vmul.f32 %v1258, %v1260
      %v1262 = vadd.f32 %v1261, -0.16666654
      %v1263 = vmul.f32 %v1258, %v1262
      %v1264 = vadd.f32 %v1263, 1.0
      %v1265 = vmul.f32 %v1264, %v1249
      %vm1266 = vweird.f32 %v657
      %v1267 = vadd.s32 %v1250, 3
      %v1268 = vand.u32 %v1267, 3
      %vm1269 = vcmp.lt.s32.totalorder %v1268, 2
      %vm1270 = vcmp.eq.s32.totalorder %v1268, 0
      %v1271 = vxor.u32 %v1265, 2147483648
      %v1272 = vsel %vm1270, %v1257, %v1271
      %vm1273 = vcmp.eq.s32.totalorder %v1268, 2
      %v1274 = vxor.u32 %v1257, 2147483648
      %v1275 = vsel %vm1273, %v1274, %v1265
      %v1276 = vsel %vm1269, %v1272, %v1275
      %v1277 = vsel %vm1266, nan, %v1276
      %v1278 = vpack.c.bf16 %v1122, %v812
      %v1279 = vpack.c.bf16 %v1277, %v967
      %v1280 = vld [vmem:[%s4] sm:$0xf]
      %v1281 = vld [vmem:[%s4 + $0x4] sm:$0xf]
      %v1282 = vld [vmem:[%s4 + $0x8] sm:$0xf]
      %v1283 = vld [vmem:[%s4 + $0xc] sm:$0xf]
      %v1284 = vld [vmem:[%s4 + $0x10] sm:$0xf]
      %v1285 = vld [vmem:[%s4 + $0x14] sm:$0xf]
      %v1286 = vld [vmem:[%s4 + $0x18] sm:$0xf]
      %v1287 = vld [vmem:[%s4 + $0x1c] sm:$0xf]
      %v1288 = vld [vmem:[%s4 + $0x20] sm:$0xf]
      %v1289 = vld [vmem:[%s4 + $0x24] sm:$0xf]
      %v1290 = vld [vmem:[%s4 + $0x28] sm:$0xf]
      %v1291 = vld [vmem:[%s4 + $0x2c] sm:$0xf]
      %v1292 = vld [vmem:[%s4 + $0x30] sm:$0xf]
      %v1293 = vld [vmem:[%s4 + $0x34] sm:$0xf]
      %v1294 = vld [vmem:[%s4 + $0x38] sm:$0xf]
      %v1295 = vld [vmem:[%s4 + $0x3c] sm:$0xf]
      %v1296 = vld [vmem:[%s4 + $0x40] sm:$0xf]
      %v1297 = vld [vmem:[%s4 + $0x44] sm:$0xf]
      %v1298 = vld [vmem:[%s4 + $0x48] sm:$0xf]
      %v1299 = vld [vmem:[%s4 + $0x4c] sm:$0xf]
      %v1300 = vld [vmem:[%s4 + $0x50] sm:$0xf]
      %v1301 = vld [vmem:[%s4 + $0x54] sm:$0xf]
      %v1302 = vld [vmem:[%s4 + $0x58] sm:$0xf]
      %v1303 = vld [vmem:[%s4 + $0x5c] sm:$0xf]
      %v1304 = vld [vmem:[%s4 + $0x60] sm:$0xf]
      %v1305 = vld [vmem:[%s4 + $0x64] sm:$0xf]
      %v1306 = vld [vmem:[%s4 + $0x68] sm:$0xf]
      %v1307 = vld [vmem:[%s4 + $0x6c] sm:$0xf]
      %v1308 = vld [vmem:[%s4 + $0x70] sm:$0xf]
      %v1309 = vld [vmem:[%s4 + $0x74] sm:$0xf]
      %v1310 = vld [vmem:[%s4 + $0x78] sm:$0xf]
      %v1311 = vld [vmem:[%s4 + $0x7c] sm:$0xf]
      %v1312 = vld [vmem:[%s5] sm:$0x1]
      %1313 = vset.pattern.permute.xlu0 100
      %1314 = vperm.xlu0 %1313, %v445
      %v1315 = vpop.permute.xlu0 %1314
      %1317 = vset.pattern.permute.xlu0 100
      %1318 = vperm.xlu0 %1317, %v446
      %v1319 = vpop.permute.xlu0 %1318
      %v1321 = vperm.slane %v1312, 0
      %v1322 = vmul.f32 %v1315, %v1321
      %v1323 = vmul.f32 %v1319, %v1321
      %v1356 = vunpack.c.l.b16 %v1280
      %v1357 = vunpack.c.l.b16 %v1281
      %v1358 = vunpack.c.l.b16 %v1282
      %v1359 = vunpack.c.l.b16 %v1283
      %v1360 = vunpack.c.l.b16 %v1284
      %v1361 = vunpack.c.l.b16 %v1285
      %v1362 = vunpack.c.l.b16 %v1286
      %v1363 = vunpack.c.l.b16 %v1287
      %v1364 = vunpack.c.l.b16 %v1288
      %v1365 = vunpack.c.l.b16 %v1289
      %v1366 = vunpack.c.l.b16 %v1290
      %v1367 = vunpack.c.l.b16 %v1291
      %v1368 = vunpack.c.l.b16 %v1292
      %v1369 = vunpack.c.l.b16 %v1293
      %v1370 = vunpack.c.l.b16 %v1294
      %v1371 = vunpack.c.l.b16 %v1295
      %v1372 = vunpack.c.l.b16 %v1296
      %v1373 = vunpack.c.l.b16 %v1297
      %v1374 = vunpack.c.l.b16 %v1298
      %v1375 = vunpack.c.l.b16 %v1299
      %v1376 = vunpack.c.l.b16 %v1300
      %v1377 = vunpack.c.l.b16 %v1301
      %v1378 = vunpack.c.l.b16 %v1302
      %v1379 = vunpack.c.l.b16 %v1303
      %v1380 = vunpack.c.l.b16 %v1304
      %v1381 = vunpack.c.l.b16 %v1305
      %v1382 = vunpack.c.l.b16 %v1306
      %v1383 = vunpack.c.l.b16 %v1307
      %v1384 = vunpack.c.l.b16 %v1308
      %v1385 = vunpack.c.l.b16 %v1309
      %v1386 = vunpack.c.l.b16 %v1310
      %v1387 = vunpack.c.l.b16 %v1311
      %v1388 = vpack.c.b16 %v1357, %v1356
      %v1389 = vpack.c.b16 %v1359, %v1358
      %v1390 = vpack.c.b16 %v1361, %v1360
      %v1391 = vpack.c.b16 %v1363, %v1362
      %v1392 = vpack.c.b16 %v1365, %v1364
      %v1393 = vpack.c.b16 %v1367, %v1366
      %v1394 = vpack.c.b16 %v1369, %v1368
      %v1395 = vpack.c.b16 %v1371, %v1370
      %v1396 = vpack.c.b16 %v1373, %v1372
      %v1397 = vpack.c.b16 %v1375, %v1374
      %v1398 = vpack.c.b16 %v1377, %v1376
      %v1399 = vpack.c.b16 %v1379, %v1378
      %v1400 = vpack.c.b16 %v1381, %v1380
      %v1401 = vpack.c.b16 %v1383, %v1382
      %v1402 = vpack.c.b16 %v1385, %v1384
      %v1403 = vpack.c.b16 %v1387, %v1386
      %1420 = vmatpush.bf16.msra.mxu0 %v1395
      %1421 = vmatpush.bf16.msra.mxu0 %v1394
      %1422 = vmatpush.bf16.msra.mxu0 %v1393
      %1423 = vmatpush.bf16.msra.mxu0 %v1392
      %1424 = vmatpush.bf16.msra.mxu0 %v1391
      %1425 = vmatpush.bf16.msra.mxu0 %v1390
      %1426 = vmatpush.bf16.msra.mxu0 %v1389
      %1427 = vmatpush.bf16.msra.mxu0 %v1388
      %1428 = vmatmul.bf16.gmra.mxu0 %v1278
      %v1429 = vpop.f32.mrf.mxu0
      %v1430 = vadd.f32 %v1322, %v1429
      %v1431 = vpop.f32.mrf.mxu0
      %v1432 = vadd.f32 %v1323, %v1431
      %1433 = vdwg.mxu0
      %1434 = vmatpush.bf16.msra.mxu0 %v1403
      %1435 = vmatpush.bf16.msra.mxu0 %v1402
      %1436 = vmatpush.bf16.msra.mxu0 %v1401
      %1437 = vmatpush.bf16.msra.mxu0 %v1400
      %1438 = vmatpush.bf16.msra.mxu0 %v1399
      %1439 = vmatpush.bf16.msra.mxu0 %v1398
      %1440 = vmatpush.bf16.msra.mxu0 %v1397
      %1441 = vmatpush.bf16.msra.mxu0 %v1396
      %1442 = vmatmul.bf16.gmra.mxu0 %v1279
      %v1443 = vpop.f32.mrf.mxu0
      %v1444 = vadd.f32 %v1430, %v1443
      %v1445 = vpop.f32.mrf.mxu0
      %v1446 = vadd.f32 %v1432, %v1445
      %1447 = vdwg.mxu0
      %v1448 = vld [vmem:[%s5 + $0x1] sm:$0x1]
      %1449 = vset.pattern.permute.xlu0 101
      %1450 = vperm.xlu0 %1449, %v445
      %v1451 = vpop.permute.xlu0 %1450
      %1453 = vset.pattern.permute.xlu0 101
      %1454 = vperm.xlu0 %1453, %v446
      %v1455 = vpop.permute.xlu0 %1454
      %v1457 = vperm.slane %v1448, 0
      %v1458 = vmul.f32 %v1451, %v1457
      %v1459 = vmul.f32 %v1455, %v1457
      %v1460 = vadd.f32 %v1444, %v1458
      %v1461 = vadd.f32 %v1446, %v1459
      %v1462 = vld [vmem:[%s6] sm:$0x1]
      %v1464 = vperm.slane %v1462, 0
      %v1466 = vadd.f32 %v1460, %v1464
      %v1467 = vadd.f32 %v1461, %v1464
      %v1468 = vxor.u32 %v1466, 2147483648
      %v1469 = vxor.u32 %v1467, 2147483648
      %v1470 = vmul.f32 %v1468, 1.442695
      %v1471 = vpow.pop %v1470
      %v1472 = vmul.f32 %v1469, 1.442695
      %v1473 = vpow.pop %v1472
      %v1474 = vadd.f32 %v1471, 1.0
      %v1475 = vadd.f32 %v1473, 1.0
      %v1476 = vrcp.pop %v1474
      %v1477 = vmul.f32 %v1474, %v1476
      %v1478 = vsub.f32 1.0, %v1477
      %v1479 = vmul.f32 %v1476, %v1478
      %v1480 = vadd.f32 %v1476, %v1479
      %vm1481 = vweird.f32 %v1474
      %vm1482 = vweird.f32 %v1476
      %vm1483 = vmor %vm1481, %vm1482
      %v1484 = vsel %vm1483, %v1476, %v1480
      %v1485 = vand.u32 2147483647, %v1474
      %vm1486 = vcmp.eq.f32.partialorder %v1485, 8.507059e+37
      %v1487 = vand.u32 %v1474, 2147483648
      %v1488 = vor.u32 1.1754944e-38, %v1487
      %v1489 = vsel %vm1486, %v1488, %v1484
      %v1490 = vmul.f32 1.0, %v1489
      %v1491 = vrcp.pop %v1475
      %v1492 = vmul.f32 %v1475, %v1491
      %v1493 = vsub.f32 1.0, %v1492
      %v1494 = vmul.f32 %v1491, %v1493
      %v1495 = vadd.f32 %v1491, %v1494
      %vm1496 = vweird.f32 %v1475
      %vm1497 = vweird.f32 %v1491
      %vm1498 = vmor %vm1496, %vm1497
      %v1499 = vsel %vm1498, %v1491, %v1495
      %v1500 = vand.u32 2147483647, %v1475
      %vm1501 = vcmp.eq.f32.partialorder %v1500, 8.507059e+37
      %v1502 = vand.u32 %v1475, 2147483648
      %v1503 = vor.u32 1.1754944e-38, %v1502
      %v1504 = vsel %vm1501, %v1503, %v1499
      %v1505 = vmul.f32 1.0, %v1504
      %v1506 = vmul.f32 %v1466, %v1490
      %v1507 = vmul.f32 %v1467, %v1505
      %v1508 = vpack.c.bf16 %v1507, %v1506
      %v1509 = vld [vmem:[%s7] sm:$0xf]
      %v1510 = vld [vmem:[%s7 + $0x4] sm:$0xf]
      %v1511 = vld [vmem:[%s7 + $0x8] sm:$0xf]
      %v1512 = vld [vmem:[%s7 + $0xc] sm:$0xf]
      %v1513 = vld [vmem:[%s8] sm:$0x1]
      %v1515 = vperm.slane %v1513, 0
      %v1521 = vunpack.c.l.b16 %v1509
      %v1522 = vunpack.c.l.b16 %v1510
      %v1523 = vunpack.c.l.b16 %v1511
      %v1524 = vunpack.c.l.b16 %v1512
      %v1525 = vpack.c.b16 %v1522, %v1521
      %v1526 = vpack.c.b16 %v1524, %v1523
      %v1530 = vsel %vm644, %v1508, 0
      %1532 = vmatpush.bf16.msra.mxu0 0
      %1533 = vmatpush.bf16.msra.mxu0 0
      %1534 = vmatpush.bf16.msra.mxu0 0
      %1535 = vmatpush.bf16.msra.mxu0 0
      %1536 = vmatpush.bf16.msra.mxu0 0
      %1537 = vmatpush.bf16.msra.mxu0 0
      %1538 = vmatpush.bf16.msra.mxu0 %v1526
      %1539 = vmatpush.bf16.msra.mxu0 %v1525
      %1540 = vmatmul.bf16.gmra.mxu0 %v1530
      %v1541 = vpop.f32.mrf.mxu0
      %v1542 = vadd.f32 %v1515, %v1541
      %v1543 = vpop.f32.mrf.mxu0
      %v1544 = vadd.f32 %v1515, %v1543
      %1545 = vdwg.mxu0
      %v1546 = vadd.f32 %v542, %v1542
      %v1547 = vadd.f32 %v543, %v1544
      %v1548 = vpack.c.bf16 %v1547, %v1546
      %v1549 = vld [vmem:[%s9] sm:$0xf]
      %v1550 = vld [vmem:[%s9 + $0x4] sm:$0xf]
      %v1551 = vld [vmem:[%s9 + $0x8] sm:$0xf]
      %v1552 = vld [vmem:[%s9 + $0xc] sm:$0xf]
      %v1557 = vunpack.c.l.b16 %v1549
      %v1558 = vunpack.c.l.b16 %v1550
      %v1559 = vunpack.c.l.b16 %v1551
      %v1560 = vunpack.c.l.b16 %v1552
      %v1561 = vpack.c.b16 %v1558, %v1557
      %v1562 = vpack.c.b16 %v1560, %v1559
      %v1566 = vsel %vm644, %v1548, 0
      %1568 = vmatpush.bf16.msra.mxu0 0
      %1569 = vmatpush.bf16.msra.mxu0 0
      %1570 = vmatpush.bf16.msra.mxu0 0
      %1571 = vmatpush.bf16.msra.mxu0 0
      %1572 = vmatpush.bf16.msra.mxu0 0
      %1573 = vmatpush.bf16.msra.mxu0 0
      %1574 = vmatpush.bf16.msra.mxu0 %v1562
      %1575 = vmatpush.bf16.msra.mxu0 %v1561
      %1576 = vmatmul.bf16.gmra.mxu0 %v1566
      %v1577 = vpop.f32.mrf.mxu0
      %v1578 = vadd.f32 0.0, %v1577
      %v1579 = vpop.f32.mrf.mxu0
      %v1580 = vadd.f32 0.0, %v1579
      %1581 = vdwg.mxu0
      %v1582 = vadd.f32 %v510, %v1578
      %v1583 = vadd.f32 %v512, %v1580
      %v1584 = vld [vmem:[%s10] sm:$0x1]
      %v1586 = vperm.slane %v1584, 0
      %v1588 = vadd.f32 %v1582, %v1586
      %v1589 = vadd.f32 %v1583, %v1586
      %v1590 = vxor.u32 %v1588, 2147483648
      %v1591 = vxor.u32 %v1589, 2147483648
      %v1592 = vmul.f32 %v1590, 1.442695
      %v1593 = vpow.pop %v1592
      %v1594 = vmul.f32 %v1591, 1.442695
      %v1595 = vpow.pop %v1594
      %v1596 = vadd.f32 %v1593, 1.0
      %v1597 = vadd.f32 %v1595, 1.0
      %v1598 = vrcp.pop %v1596
      %v1599 = vmul.f32 %v1596, %v1598
      %v1600 = vsub.f32 1.0, %v1599
      %v1601 = vmul.f32 %v1598, %v1600
      %v1602 = vadd.f32 %v1598, %v1601
      %vm1603 = vweird.f32 %v1596
      %vm1604 = vweird.f32 %v1598
      %vm1605 = vmor %vm1603, %vm1604
      %v1606 = vsel %vm1605, %v1598, %v1602
      %v1607 = vand.u32 2147483647, %v1596
      %vm1608 = vcmp.eq.f32.partialorder %v1607, 8.507059e+37
      %v1609 = vand.u32 %v1596, 2147483648
      %v1610 = vor.u32 1.1754944e-38, %v1609
      %v1611 = vsel %vm1608, %v1610, %v1606
      %v1612 = vmul.f32 1.0, %v1611
      %v1613 = vrcp.pop %v1597
      %v1614 = vmul.f32 %v1597, %v1613
      %v1615 = vsub.f32 1.0, %v1614
      %v1616 = vmul.f32 %v1613, %v1615
      %v1617 = vadd.f32 %v1613, %v1616
      %vm1618 = vweird.f32 %v1597
      %vm1619 = vweird.f32 %v1613
      %vm1620 = vmor %vm1618, %vm1619
      %v1621 = vsel %vm1620, %v1613, %v1617
      %v1622 = vand.u32 2147483647, %v1597
      %vm1623 = vcmp.eq.f32.partialorder %v1622, 8.507059e+37
      %v1624 = vand.u32 %v1597, 2147483648
      %v1625 = vor.u32 1.1754944e-38, %v1624
      %v1626 = vsel %vm1623, %v1625, %v1621
      %v1627 = vmul.f32 1.0, %v1626
      %v1628 = vmul.f32 %v1588, %v1612
      %v1629 = vmul.f32 %v1589, %v1627
      %v1630 = vpack.c.bf16 %v1629, %v1628
      %v1631 = vld [vmem:[%s11] sm:$0xf]
      %v1632 = vld [vmem:[%s11 + $0x4] sm:$0xf]
      %v1633 = vld [vmem:[%s11 + $0x8] sm:$0xf]
      %v1634 = vld [vmem:[%s11 + $0xc] sm:$0xf]
      %v1635 = vld [vmem:[%s11 + $0x10] sm:$0xf]
      %v1636 = vld [vmem:[%s11 + $0x14] sm:$0xf]
      %v1637 = vld [vmem:[%s11 + $0x18] sm:$0xf]
      %v1638 = vld [vmem:[%s11 + $0x1c] sm:$0xf]
      %v1639 = vld [vmem:[%s11 + $0x20] sm:$0xf]
      %v1640 = vld [vmem:[%s11 + $0x24] sm:$0xf]
      %v1641 = vld [vmem:[%s11 + $0x28] sm:$0xf]
      %v1642 = vld [vmem:[%s11 + $0x2c] sm:$0xf]
      %v1643 = vld [vmem:[%s11 + $0x30] sm:$0xf]
      %v1644 = vld [vmem:[%s11 + $0x34] sm:$0xf]
      %v1645 = vld [vmem:[%s11 + $0x38] sm:$0xf]
      %v1646 = vld [vmem:[%s11 + $0x3c] sm:$0xf]
      %v1647 = vld [vmem:[%s12] sm:$0x1]
      %v1649 = vperm.slane %v1647, 0
      %v1667 = vunpack.c.l.b16 %v1631
      %v1668 = vunpack.c.l.b16 %v1632
      %v1669 = vunpack.c.l.b16 %v1633
      %v1670 = vunpack.c.l.b16 %v1634
      %v1671 = vunpack.c.l.b16 %v1635
      %v1672 = vunpack.c.l.b16 %v1636
      %v1673 = vunpack.c.l.b16 %v1637
      %v1674 = vunpack.c.l.b16 %v1638
      %v1675 = vunpack.c.l.b16 %v1639
      %v1676 = vunpack.c.l.b16 %v1640
      %v1677 = vunpack.c.l.b16 %v1641
      %v1678 = vunpack.c.l.b16 %v1642
      %v1679 = vunpack.c.l.b16 %v1643
      %v1680 = vunpack.c.l.b16 %v1644
      %v1681 = vunpack.c.l.b16 %v1645
      %v1682 = vunpack.c.l.b16 %v1646
      %v1683 = vpack.c.b16 %v1668, %v1667
      %v1684 = vpack.c.b16 %v1670, %v1669
      %v1685 = vpack.c.b16 %v1672, %v1671
      %v1686 = vpack.c.b16 %v1674, %v1673
      %v1687 = vpack.c.b16 %v1676, %v1675
      %v1688 = vpack.c.b16 %v1678, %v1677
      %v1689 = vpack.c.b16 %v1680, %v1679
      %v1690 = vpack.c.b16 %v1682, %v1681
      %1699 = vmatpush.bf16.msra.mxu0 %v1690
      %1700 = vmatpush.bf16.msra.mxu0 %v1689
      %1701 = vmatpush.bf16.msra.mxu0 %v1688
      %1702 = vmatpush.bf16.msra.mxu0 %v1687
      %1703 = vmatpush.bf16.msra.mxu0 %v1686
      %1704 = vmatpush.bf16.msra.mxu0 %v1685
      %1705 = vmatpush.bf16.msra.mxu0 %v1684
      %1706 = vmatpush.bf16.msra.mxu0 %v1683
      %1707 = vmatmul.bf16.gmra.mxu0 %v1630
      %v1708 = vpop.f32.mrf.mxu0
      %v1709 = vadd.f32 %v1649, %v1708
      %v1710 = vpop.f32.mrf.mxu0
      %v1711 = vadd.f32 %v1649, %v1710
      %1712 = vdwg.mxu0
      %1714 = vset.pattern.permute.xlu0 0
      %1715 = vperm.xlu0 %1714, %v1709
      %v1716 = vpop.permute.xlu0 %1715
      %1719 = vset.pattern.permute.xlu0 0
      %1720 = vperm.xlu0 %1719, %v1711
      %v1721 = vpop.permute.xlu0 %1720
      %v1723 = vmul.f32 %v1716, %v445
      %v1724 = vmul.f32 %v1721, %v446
      %1725 = vset.pattern.permute.xlu0 1
      %1726 = vperm.xlu0 %1725, %v1709
      %v1727 = vpop.permute.xlu0 %1726
      %1729 = vset.pattern.permute.xlu0 1
      %1730 = vperm.xlu0 %1729, %v1711
      %v1731 = vpop.permute.xlu0 %1730
      %v1733 = vmul.f32 %v1727, %v445
      %v1734 = vmul.f32 %v1731, %v446
      %1737 = vrot.lane.b32.xlu0 %v1733, 120
      %v1738 = vpop.permute.xlu0 %1737
      %1739 = vrot.lane.b32.xlu0 %v1734, 120
      %v1740 = vpop.permute.xlu0 %1739
      %v1743 = vadd.f32 %v1723, %v1738
      %v1744 = vadd.f32 %v1724, %v1740
      %1745 = vset.pattern.permute.xlu0 2
      %1746 = vperm.xlu0 %1745, %v1709
      %v1747 = vpop.permute.xlu0 %1746
      %1749 = vset.pattern.permute.xlu0 2
      %1750 = vperm.xlu0 %1749, %v1711
      %v1751 = vpop.permute.xlu0 %1750
      %v1753 = vmul.f32 %v1747, %v445
      %v1754 = vmul.f32 %v1751, %v446
      %1757 = vrot.lane.b32.xlu0 %v1753, 112
      %v1758 = vpop.permute.xlu0 %1757
      %1759 = vrot.lane.b32.xlu0 %v1754, 112
      %v1760 = vpop.permute.xlu0 %1759
      %v1763 = vadd.f32 %v1743, %v1758
      %v1764 = vadd.f32 %v1744, %v1760
      %1767 = vrot.lane.b32.xlu0 %v1763, 24
      %v1768 = vpop.permute.xlu0 %1767
      %1769 = vrot.lane.b32.xlu0 %v1764, 24
      %v1770 = vpop.permute.xlu0 %1769
      %vm1773 = vcmask 64512
      %1774 = vst.msk [vmem:[%s442] sm:$0xff] %vm1773, %v1768
      %1775 = vst.msk [vmem:[%s442 + $0x8] sm:$0xff] %vm1773, %v1770
      %s1776 = smul.u32 2, %s24
      %p1777 = scmp.lt.s32.totalorder %s1776, 5
      %s1778 = scalar_select %p1777, %s1776, 5
      %s1779 = smul.addr %s1778, 8
      %s1780 = scalar_lea.vmem %s13, %s1779
      // Predicated region
      $region73: #{tpu_custom_call.1} parent=71 // pred_check
        %p1781 = pneg %p320
      $region74: #{tpu_custom_call.1} parent=71 // pred_check_branch
        %1783 = sbr.rel (%p1781) target = $region76
      $region75: #{tpu_custom_call.1} parent=71 // pred_region
        %s1784 = smul.u32 2, %s24
      $region76: #{tpu_custom_call.1} parent=71 // pred_fallthru
        _
    $region72: #{tpu_custom_call.1} parent=5 // pred_fallthru
      _
    %p1785 = scmp.le.s32.totalorder 2, %s19
    // Predicated region
    $region77: #{tpu_custom_call.1} parent=5 // pred_check
      %p1786 = pneg %p1785
    $region78: #{tpu_custom_call.1} parent=5 // pred_check_branch
      %1788 = sbr.rel (%p1786) target = $region80
    $region79: #{tpu_custom_call.1} parent=5 // pred_region
      %s1789 = ssub.s32 %s19, 2
      // Predicated region
      $region81: #{tpu_custom_call.1} parent=79 // pred_check
        %p1790 = pneg %p326
      $region82: #{tpu_custom_call.1} parent=79 // pred_check_branch
        %1792 = sbr.rel (%p1790) target = $region84
      $region83: #{tpu_custom_call.1} parent=79 // pred_region
        %s1793 = smul.u32 2, %s25
        %p1794 = scmp.lt.s32.totalorder %s1793, 5
        %s1795 = scalar_select %p1794, %s1793, 5
        %s1796 = smul.addr %s1795, 8
        %s1797 = scalar_lea.vmem %s13, %s1796
      $region84: #{tpu_custom_call.1} parent=79 // pred_fallthru
        _
    $region80: #{tpu_custom_call.1} parent=5 // pred_fallthru
      _
  $region6: #{tpu_custom_call.1} parent=0 // loop_footer
    %s23 = sadd.s32 1, %s19
  $region7: #{tpu_custom_call.1} parent=0 // loop_footer_branch
    %18 = sbr.rel target = $region3
  $region8: #{tpu_custom_call.1} parent=0 // loop_exit
    _

</llo_original>
